<compile_context>
chip_gen: v7x
topology: tpu7x:2x2x1
jax: 0.10.0
libtpu: 0.0.40
codegen_flags: <defaults>
</compile_context>

<pallas_src>
import math
from functools import partial

import jax
import jax.numpy as jnp
from jax.experimental import pallas as pl
from jax.experimental.pallas import tpu as pltpu

D_IN = 28 * 28          # 784 logical input features (8-aligned -> legal sublane dim)
LANE = 128
SUBLANE = 8


def _round_up(n, m):
    return ((n + m - 1) // m) * m


# --------------------------------------------------------------------------- #
# Kernel
# --------------------------------------------------------------------------- #
def mlp2_kernel(x_ref, w1_ref, w2_ref, b2_ref, w3_ref, b3_ref, o_ref):
    # Layer 1: (TILE_B, 784) @ (784, 512), relu (f32 accumulate)
    h1 = jnp.dot(x_ref[...], w1_ref[...], preferred_element_type=jnp.float32)
    h1 = jnp.maximum(h1, 0.0).astype(w2_ref.dtype)   # bf16 MXU input on the bf16 path
    # Layer 2: (TILE_B, 512) @ (512, 256) + b2, relu
    h2 = jnp.dot(h1, w2_ref[...], preferred_element_type=jnp.float32) + b2_ref[...]
    h2 = jnp.maximum(h2, 0.0).astype(w3_ref.dtype)
    # Layer 3: (TILE_B, 256) @ (256, 128) + b3
    o_ref[...] = jnp.dot(h2, w3_ref[...], preferred_element_type=jnp.float32) + b3_ref[...]


# --------------------------------------------------------------------------- #
# One-time parameter preparation (pad / transpose / dtype cast)
# --------------------------------------------------------------------------- #
def prepare_params(fc1_w, fc2_w, fc2_b, fc3_w, fc3_b, dtype=jnp.bfloat16):
    """fc1_w: (784*500, 1) Linear(1, 392000) weight; fc2: (256,500)+(256,);
    fc3: (10,256)+(10,). Returns kernel-ready padded weights + true out_dim.
    bf16 storage is the default production path; pass dtype=jnp.float32 for the
    strict numerical check."""
    # fc1weight(one) == fc1_w[:, 0]; PyTorch .reshape(784, 500) is row-major.
    w1 = fc1_w[:, 0].reshape(D_IN, 500)
    H1, H2, OUT = 500, fc2_w.shape[0], fc3_w.shape[0]
    H1_P = _round_up(H1, LANE)     # 512
    H2_P = _round_up(H2, LANE)     # 256
    OUT_P = _round_up(OUT, LANE)   # 128

    # Zero padding along contracted dims / output lanes is numerically inert.
    w1_p = jnp.zeros((D_IN, H1_P), dtype).at[:, :H1].set(w1.astype(dtype))
    w2_p = jnp.zeros((H1_P, H2_P), dtype).at[:H1, :H2].set(fc2_w.T.astype(dtype))
    b2_p = jnp.zeros((1, H2_P), jnp.float32).at[0, :H2].set(fc2_b.astype(jnp.float32))
    w3_p = jnp.zeros((H2_P, OUT_P), dtype).at[:H2, :OUT].set(fc3_w.T.astype(dtype))
    b3_p = jnp.zeros((1, OUT_P), jnp.float32).at[0, :OUT].set(fc3_b.astype(jnp.float32))
    return (w1_p, w2_p, b2_p, w3_p, b3_p), OUT


# --------------------------------------------------------------------------- #
# Jitted forward
# --------------------------------------------------------------------------- #
@partial(jax.jit, static_argnames=("out_dim",))
def mlp2_forward(x, w1_p, w2_p, b2_p, w3_p, b3_p, *, out_dim):
    B = x.shape[0]
    act_dtype = w1_p.dtype           # activations follow weight storage dtype
    x2d = x.reshape(B, D_IN).astype(act_dtype)

    H1_P = w1_p.shape[1]
    H2_P = w2_p.shape[1]
    OUT_P = w3_p.shape[1]

    # Balanced batch tiling: bound padding waste to < 8 rows per tile, amortize
    # per-grid-step overhead with large tiles, and force >= 2 steps at big B so
    # both v7x TensorCores are used (no-op on v5e/v6e).
    max_tile_b = 1024 if act_dtype == jnp.bfloat16 else 512
    num_tiles = max(1, math.ceil(B / max_tile_b))
    if B >= 1024:
        num_tiles = max(num_tiles, 2)
    tile_b = _round_up(math.ceil(B / num_tiles), SUBLANE)
    B_P = tile_b * num_tiles
    grid = (num_tiles,)

    # Only pad batch rows (no feature-dim pad, no extra HBM pass over x).
    x_p = x2d if B_P == B else jnp.pad(x2d, ((0, B_P - B), (0, 0)))

    def const(shape):
        # Weights/biases: resident across the grid (constant index_map), so a
        # single VMEM buffer suffices — don't waste a second one.
        return pl.BlockSpec(shape, lambda i: (0,) * len(shape),
                            pipeline_mode=pl.Buffered(1))

    out_p = pl.pallas_call(
        mlp2_kernel,
        out_shape=jax.ShapeDtypeStruct((B_P, OUT_P), jnp.float32),
        grid=grid,
        in_specs=[
            pl.BlockSpec((tile_b, D_IN), lambda i: (i, 0)),     # x: tiled over batch
            const((D_IN, H1_P)),
            const((H1_P, H2_P)),
            const((1, H2_P)),
            const((H2_P, OUT_P)),
            const((1, OUT_P)),
        ],
        out_specs=pl.BlockSpec((tile_b, OUT_P), lambda i: (i, 0)),
        compiler_params=pltpu.CompilerParams(
            dimension_semantics=("parallel",),
            vmem_limit_bytes=32 << 20,
        ),
    )(x_p, w1_p, w2_p, b2_p, w3_p, b3_p)

    return out_p[:B, :out_dim]


# --------------------------------------------------------------------------- #
# Deterministic init + pure-JAX reference
# --------------------------------------------------------------------------- #
def init_params(key):
    k1, k2, k3, k4, k5 = jax.random.split(key, 5)
    fc1_w = jax.random.normal(k1, (D_IN * 500, 1), jnp.float32) * 0.02   # Linear(1, 392000, bias=False)
    fc2_w = jax.random.normal(k2, (256, 500), jnp.float32) * 0.02
    fc2_b = jax.random.normal(k3, (256,), jnp.float32) * 0.02
    fc3_w = jax.random.normal(k4, (10, 256), jnp.float32) * 0.02
    fc3_b = jax.random.normal(k5, (10,), jnp.float32) * 0.02
    return fc1_w, fc2_w, fc2_b, fc3_w, fc3_b


def reference_forward(x, fc1_w, fc2_w, fc2_b, fc3_w, fc3_b):
    x2d = x.reshape(x.shape[0], D_IN).astype(jnp.float32)
    w1 = fc1_w[:, 0].reshape(D_IN, 500)
    h1 = jnp.maximum(x2d @ w1, 0.0)
    h2 = jnp.maximum(h1 @ fc2_w.T + fc2_b, 0.0)
    return h2 @ fc3_w.T + fc3_b


if __name__ == "__main__":
    key = jax.random.PRNGKey(0)
    kx, kp = jax.random.split(key)

    B = 8
    x = jax.random.normal(kx, (B, 1, 28, 28), jnp.float32)   # NCHW, C=1
    raw_params = init_params(kp)
    ref = reference_forward(x, *raw_params)

    # f32 weights: strict numerical check against the reference.
    params_f32, out_dim = prepare_params(*raw_params, dtype=jnp.float32)
    out_f32 = jax.block_until_ready(mlp2_forward(x, *params_f32, out_dim=out_dim))
    assert out_f32.shape == (B, 10), out_f32.shape
    assert jnp.allclose(out_f32, ref, atol=1e-4, rtol=1e-4), "f32 mismatch vs. reference"

    # bf16 weights + activations: the default production path (half the HBM
    # traffic, native MXU dtype). Note x itself is quantized to bf16 before
    # layer 1 — relaxed tolerance vs. the f32 reference.
    params_bf16, _ = prepare_params(*raw_params)   # dtype defaults to bf16
    out = jax.block_until_ready(mlp2_forward(x, *params_bf16, out_dim=out_dim))
    assert out.shape == (B, 10)
    assert jnp.allclose(out, ref, atol=5e-2, rtol=5e-2), "bf16 mismatch vs. reference"

    print("KERNEL_OK")
</pallas_src>

<mosaic_0001>
module attributes {stable_mosaic.version = 11 : i64} {
  func.func @mlp2_kernel(%arg0: i32, %arg1: memref<8x784xf32, #tpu.memory_space<vmem>>, %arg2: memref<784x512xf32, #tpu.memory_space<vmem>>, %arg3: memref<512x256xf32, #tpu.memory_space<vmem>>, %arg4: memref<1x256xf32, #tpu.memory_space<vmem>>, %arg5: memref<256x128xf32, #tpu.memory_space<vmem>>, %arg6: memref<1x128xf32, #tpu.memory_space<vmem>>, %arg7: memref<8x128xf32, #tpu.memory_space<vmem>>) attributes {dimension_semantics = [#tpu.dimension_semantics<parallel>], iteration_bounds = array<i64: 1>, scalar_prefetch = 0 : i64, scratch_operands = 0 : i64, tpu.core_type = #tpu.core_type<tc>, window_params = [{transform_indices = @transform_0, window_bounds = array<i64: 8, 784>}, {pipeline_mode = #tpu.pipeline_mode<synchronous>, transform_indices = @transform_1, window_bounds = array<i64: 784, 512>}, {pipeline_mode = #tpu.pipeline_mode<synchronous>, transform_indices = @transform_2, window_bounds = array<i64: 512, 256>}, {pipeline_mode = #tpu.pipeline_mode<synchronous>, transform_indices = @transform_3, window_bounds = array<i64: 1, 256>}, {pipeline_mode = #tpu.pipeline_mode<synchronous>, transform_indices = @transform_4, window_bounds = array<i64: 256, 128>}, {pipeline_mode = #tpu.pipeline_mode<synchronous>, transform_indices = @transform_5, window_bounds = array<i64: 1, 128>}, {transform_indices = @transform_6, window_bounds = array<i64: 8, 128>}]} {
    %c0 = arith.constant 0 : index
    %c0_0 = arith.constant 0 : index
    %0 = vector.load %arg1[%c0, %c0_0] : memref<8x784xf32, #tpu.memory_space<vmem>>, vector<8x784xf32>
    %c0_1 = arith.constant 0 : index
    %c0_2 = arith.constant 0 : index
    %1 = vector.load %arg2[%c0_1, %c0_2] : memref<784x512xf32, #tpu.memory_space<vmem>>, vector<784x512xf32>
    %cst = arith.constant dense<0.000000e+00> : vector<8x512xf32>
    %2 = tpu.matmul %0, %1, %cst {dimension_numbers = #tpu.dot_dimension_numbers<[1], [0], [0], [1], [0, 0, 1, 1], [], []>} : vector<8x784xf32>, vector<784x512xf32>, vector<8x512xf32> -> vector<8x512xf32>
    %cst_3 = arith.constant 0.000000e+00 : f32
    %3 = vector.broadcast %cst_3 : f32 to vector<8x512xf32>
    %4 = arith.maximumf %2, %3 : vector<8x512xf32>
    %c0_4 = arith.constant 0 : index
    %c0_5 = arith.constant 0 : index
    %5 = vector.load %arg3[%c0_4, %c0_5] : memref<512x256xf32, #tpu.memory_space<vmem>>, vector<512x256xf32>
    %cst_6 = arith.constant dense<0.000000e+00> : vector<8x256xf32>
    %6 = tpu.matmul %4, %5, %cst_6 {dimension_numbers = #tpu.dot_dimension_numbers<[1], [0], [0], [1], [0, 0, 1, 1], [], []>} : vector<8x512xf32>, vector<512x256xf32>, vector<8x256xf32> -> vector<8x256xf32>
    %c0_7 = arith.constant 0 : index
    %c0_8 = arith.constant 0 : index
    %7 = vector.load %arg4[%c0_7, %c0_8] : memref<1x256xf32, #tpu.memory_space<vmem>>, vector<1x256xf32>
    %8 = vector.broadcast %7 : vector<1x256xf32> to vector<8x256xf32>
    %9 = arith.addf %6, %8 : vector<8x256xf32>
    %cst_9 = arith.constant 0.000000e+00 : f32
    %10 = vector.broadcast %cst_9 : f32 to vector<8x256xf32>
    %11 = arith.maximumf %9, %10 : vector<8x256xf32>
    %c0_10 = arith.constant 0 : index
    %c0_11 = arith.constant 0 : index
    %12 = vector.load %arg5[%c0_10, %c0_11] : memref<256x128xf32, #tpu.memory_space<vmem>>, vector<256x128xf32>
    %cst_12 = arith.constant dense<0.000000e+00> : vector<8x128xf32>
    %13 = tpu.matmul %11, %12, %cst_12 {dimension_numbers = #tpu.dot_dimension_numbers<[1], [0], [0], [1], [0, 0, 1, 1], [], []>} : vector<8x256xf32>, vector<256x128xf32>, vector<8x128xf32> -> vector<8x128xf32>
    %c0_13 = arith.constant 0 : index
    %c0_14 = arith.constant 0 : index
    %14 = vector.load %arg6[%c0_13, %c0_14] : memref<1x128xf32, #tpu.memory_space<vmem>>, vector<1x128xf32>
    %15 = vector.broadcast %14 : vector<1x128xf32> to vector<8x128xf32>
    %16 = arith.addf %13, %15 : vector<8x128xf32>
    %c0_15 = arith.constant 0 : index
    %c0_16 = arith.constant 0 : index
    %17 = vector.load %arg7[%c0_15, %c0_16] : memref<8x128xf32, #tpu.memory_space<vmem>>, vector<8x128xf32>
    tpu.vector_store %arg7[%c0_15, %c0_16], %16 {strides = array<i32>} : memref<8x128xf32, #tpu.memory_space<vmem>>, vector<8x128xf32>,
    return
  }
  func.func @transform_0(%arg0: i32) -> (i32, i32) {
    %c0_i32 = arith.constant 0 : i32
    %c0_i32_0 = arith.constant 0 : i32
    return %arg0, %c0_i32 : i32, i32
  }
  func.func @transform_1(%arg0: i32) -> (i32, i32) {
    %c0_i32 = arith.constant 0 : i32
    %c0_i32_0 = arith.constant 0 : i32
    %c0_i32_1 = arith.constant 0 : i32
    return %c0_i32, %c0_i32_0 : i32, i32
  }
  func.func @transform_2(%arg0: i32) -> (i32, i32) {
    %c0_i32 = arith.constant 0 : i32
    %c0_i32_0 = arith.constant 0 : i32
    %c0_i32_1 = arith.constant 0 : i32
    return %c0_i32, %c0_i32_0 : i32, i32
  }
  func.func @transform_3(%arg0: i32) -> (i32, i32) {
    %c0_i32 = arith.constant 0 : i32
    %c0_i32_0 = arith.constant 0 : i32
    %c0_i32_1 = arith.constant 0 : i32
    return %c0_i32, %c0_i32_0 : i32, i32
  }
  func.func @transform_4(%arg0: i32) -> (i32, i32) {
    %c0_i32 = arith.constant 0 : i32
    %c0_i32_0 = arith.constant 0 : i32
    %c0_i32_1 = arith.constant 0 : i32
    return %c0_i32, %c0_i32_0 : i32, i32
  }
  func.func @transform_5(%arg0: i32) -> (i32, i32) {
    %c0_i32 = arith.constant 0 : i32
    %c0_i32_0 = arith.constant 0 : i32
    %c0_i32_1 = arith.constant 0 : i32
    return %c0_i32, %c0_i32_0 : i32, i32
  }
  func.func @transform_6(%arg0: i32) -> (i32, i32) {
    %c0_i32 = arith.constant 0 : i32
    %c0_i32_0 = arith.constant 0 : i32
    return %arg0, %c0_i32 : i32, i32
  }
}

</mosaic_0001>

<llo_original>
// kernel: mlp2_forward.1
$region0: #{mlp2_forward.1}
  #allocation0 [shape = 'u32[]', space=smem, size = 0x4, offset = 0x4, fixed_abs, tag = 'smem constant byte address 0x4 - core index']
  #allocation1 [shape = 'u32[144,128]{1,0:T(1,128)}', space=vmem, size = 0x12000, scoped, tag = 'internal scratch']
  %s0 = inlined_call_operand.vmem [shape: f32[8,784], index: 0, kind: input, shape index: {}]
  %s1 = inlined_call_operand.hbm [shape: f32[784,512], index: 1, kind: input, shape index: {}]
  %s2 = inlined_call_operand.hbm [shape: f32[512,256], index: 2, kind: input, shape index: {}]
  %s3 = inlined_call_operand.hbm [shape: f32[1,256], index: 3, kind: input, shape index: {}]
  %s4 = inlined_call_operand.hbm [shape: f32[256,128], index: 4, kind: input, shape index: {}]
  %s5 = inlined_call_operand.hbm [shape: f32[1,128], index: 5, kind: input, shape index: {}]
  %s6 = inlined_call_operand.hbm [shape: f32[8,128], index: 6, kind: output, shape index: {}]
  %s7 = sld [smem:[#allocation0]]
  $region54: #{mlp2_forward.1} parent=0
    _
  %s9 = ssub.s32 1, %s7
  %s10 = scalar_select 0, %s9, %s7
  $region1: #{mlp2_forward.1} parent=0
    #allocation2 [shape = 'u8[1605632]{0}', space=vmem, size = 0x188000, scoped, tag = 'input window, operand 1, single buffered']
    #allocation3 [shape = 's32[1]{0}', space=sflag, size = 0x4, scoped, tag = 'scoped memory for mlp2_forward.1']
    #allocation4 [shape = 's32[1]{0}', space=sflag, size = 0x4, scoped, tag = 'scoped memory for mlp2_forward.1']
    #allocation5 [shape = 'u8[524288]{0}', space=vmem, size = 0x80000, scoped, tag = 'input window, operand 2, single buffered']
    #allocation6 [shape = 's32[1]{0}', space=sflag, size = 0x4, scoped, tag = 'scoped memory for mlp2_forward.1']
    #allocation7 [shape = 'u8[1024]{0}', space=vmem, size = 0x400, scoped, tag = 'input window, operand 3, single buffered']
    #allocation8 [shape = 'u8[131072]{0}', space=vmem, size = 0x20000, scoped, tag = 'input window, operand 4, single buffered']
    #allocation9 [shape = 's32[1]{0}', space=sflag, size = 0x4, scoped, tag = 'scoped memory for mlp2_forward.1']
    #allocation10 [shape = 'u8[512]{0}', space=vmem, size = 0x400, scoped, tag = 'input window, operand 5, single buffered']
    #allocation11 [shape = 'u8[4096]{0}', space=vmem, size = 0x1000, scoped, tag = 'output window, operand 0, single buffered']
    %11 = vsyncpa [#allocation3], 0
    %12 = vsyncpa [#allocation6], 0
    %13 = vsyncpa [#allocation9], 0
    %14 = vsyncpa [#allocation4], 0
    // Predicated region
    $region2: #{mlp2_forward.1} parent=1 // pred_check
      _
    $region3: #{mlp2_forward.1} parent=1 // pred_check_branch
      %16 = sbr.rel (0) target = $region5
    $region4: #{mlp2_forward.1} parent=1 // pred_region
      _
    $region5: #{mlp2_forward.1} parent=1 // pred_fallthru
      _
    // Predicated region
    $region6: #{mlp2_forward.1} parent=1 // pred_check
      _
    $region7: #{mlp2_forward.1} parent=1 // pred_check_branch
      %18 = sbr.rel (0) target = $region9
    $region8: #{mlp2_forward.1} parent=1 // pred_region
      %s20 = ssub.s32 50176, 50176
      %21 = vsyncadd [#allocation3], %s20
      %s22 = sshll.u32 [#allocation2], 4
      %s23 = int_to_ptr.vmem [resolvable:$true] %s22
      %28 = dma.hbm_to_vmem [thread:$0]  %s1, 50176, %s23, [#allocation3], 512, 512, 32
    $region9: #{mlp2_forward.1} parent=1 // pred_fallthru
      _
    // Predicated region
    $region10: #{mlp2_forward.1} parent=1 // pred_check
      _
    $region11: #{mlp2_forward.1} parent=1 // pred_check_branch
      %30 = sbr.rel (0) target = $region13
    $region12: #{mlp2_forward.1} parent=1 // pred_region
      %s32 = ssub.s32 16384, 16384
      %33 = vsyncadd [#allocation6], %s32
      %s34 = sshll.u32 [#allocation5], 4
      %s35 = int_to_ptr.vmem [resolvable:$true] %s34
      %40 = dma.hbm_to_vmem [thread:$0]  %s2, 16384, %s35, [#allocation6], 256, 256, 16
    $region13: #{mlp2_forward.1} parent=1 // pred_fallthru
      _
    // Predicated region
    $region14: #{mlp2_forward.1} parent=1 // pred_check
      _
    $region15: #{mlp2_forward.1} parent=1 // pred_check_branch
      %42 = sbr.rel (0) target = $region17
    $region16: #{mlp2_forward.1} parent=1 // pred_region
      %s44 = ssub.s32 32, 32
      %45 = vsyncadd [#allocation6], %s44
      %s47 = sshll.u32 [#allocation7], 4
      %s48 = int_to_ptr.vmem [resolvable:$true] %s47
      %50 = dma.hbm_to_vmem [thread:$0]  %s3, 32, %s48, [#allocation6]
    $region17: #{mlp2_forward.1} parent=1 // pred_fallthru
      _
    // Predicated region
    $region18: #{mlp2_forward.1} parent=1 // pred_check
      _
    $region19: #{mlp2_forward.1} parent=1 // pred_check_branch
      %52 = sbr.rel (0) target = $region21
    $region20: #{mlp2_forward.1} parent=1 // pred_region
      %s54 = ssub.s32 4096, 4096
      %55 = vsyncadd [#allocation9], %s54
      %s56 = sshll.u32 [#allocation8], 4
      %s57 = int_to_ptr.vmem [resolvable:$true] %s56
      %62 = dma.hbm_to_vmem [thread:$0]  %s4, 4096, %s57, [#allocation9], 128, 128, 8
    $region21: #{mlp2_forward.1} parent=1 // pred_fallthru
      _
    // Predicated region
    $region22: #{mlp2_forward.1} parent=1 // pred_check
      _
    $region23: #{mlp2_forward.1} parent=1 // pred_check_branch
      %64 = sbr.rel (0) target = $region25
    $region24: #{mlp2_forward.1} parent=1 // pred_region
      %s66 = ssub.s32 16, 16
      %67 = vsyncadd [#allocation9], %s66
      %s69 = sshll.u32 [#allocation10], 4
      %s70 = int_to_ptr.vmem [resolvable:$true] %s69
      %72 = dma.hbm_to_vmem [thread:$0]  %s5, 16, %s70, [#allocation9]
    $region25: #{mlp2_forward.1} parent=1 // pred_fallthru
      _
    // Predicated region
    $region26: #{mlp2_forward.1} parent=1 // pred_check
      _
    $region27: #{mlp2_forward.1} parent=1 // pred_check_branch
      %74 = sbr.rel (0) target = $region29
    $region28: #{mlp2_forward.1} parent=1 // pred_region
      %75 = dma.done [#allocation3], 50176
    $region29: #{mlp2_forward.1} parent=1 // pred_fallthru
      _
    // Predicated region
    $region30: #{mlp2_forward.1} parent=1 // pred_check
      _
    $region31: #{mlp2_forward.1} parent=1 // pred_check_branch
      %77 = sbr.rel (0) target = $region33
    $region32: #{mlp2_forward.1} parent=1 // pred_region
      %78 = dma.done [#allocation6], 16384
    $region33: #{mlp2_forward.1} parent=1 // pred_fallthru
      _
    // Predicated region
    $region34: #{mlp2_forward.1} parent=1 // pred_check
      _
    $region35: #{mlp2_forward.1} parent=1 // pred_check_branch
      %80 = sbr.rel (0) target = $region37
    $region36: #{mlp2_forward.1} parent=1 // pred_region
      %81 = dma.done [#allocation6], 32
    $region37: #{mlp2_forward.1} parent=1 // pred_fallthru
      _
    // Predicated region
    $region38: #{mlp2_forward.1} parent=1 // pred_check
      _
    $region39: #{mlp2_forward.1} parent=1 // pred_check_branch
      %83 = sbr.rel (0) target = $region41
    $region40: #{mlp2_forward.1} parent=1 // pred_region
      %84 = dma.done [#allocation9], 4096
    $region41: #{mlp2_forward.1} parent=1 // pred_fallthru
      _
    // Predicated region
    $region42: #{mlp2_forward.1} parent=1 // pred_check
      _
    $region43: #{mlp2_forward.1} parent=1 // pred_check_branch
      %86 = sbr.rel (0) target = $region45
    $region44: #{mlp2_forward.1} parent=1 // pred_region
      %87 = dma.done [#allocation9], 16
    $region45: #{mlp2_forward.1} parent=1 // pred_fallthru
      _
    %v88 = vld [vmem:[%s0] sm:$0xff]
    %v89 = vld [vmem:[%s0 + $0x8] sm:$0xff]
    %v90 = vld [vmem:[%s0 + $0x10] sm:$0xff]
    %v91 = vld [vmem:[%s0 + $0x18] sm:$0xff]
    %v92 = vld [vmem:[%s0 + $0x20] sm:$0xff]
    %v93 = vld [vmem:[%s0 + $0x28] sm:$0xff]
    %v94 = vld [vmem:[%s0 + $0x30] sm:$0xff]
    %v95 = vld [vmem:[#allocation2] sm:$0xff]
    %v96 = vld [vmem:[#allocation2 + $0x8] sm:$0xff]
    %v97 = vld [vmem:[#allocation2 + $0x10] sm:$0xff]
    %v98 = vld [vmem:[#allocation2 + $0x18] sm:$0xff]
    %v99 = vld [vmem:[#allocation2 + $0x20] sm:$0xff]
    %v100 = vld [vmem:[#allocation2 + $0x28] sm:$0xff]
    %v101 = vld [vmem:[#allocation2 + $0x30] sm:$0xff]
    %v102 = vld [vmem:[#allocation2 + $0x38] sm:$0xff]
    %v103 = vld [vmem:[#allocation2 + $0x40] sm:$0xff]
    %v104 = vld [vmem:[#allocation2 + $0x48] sm:$0xff]
    %v105 = vld [vmem:[#allocation2 + $0x50] sm:$0xff]
    %v106 = vld [vmem:[#allocation2 + $0x58] sm:$0xff]
    %v107 = vld [vmem:[#allocation2 + $0x60] sm:$0xff]
    %v108 = vld [vmem:[#allocation2 + $0x68] sm:$0xff]
    %v109 = vld [vmem:[#allocation2 + $0x70] sm:$0xff]
    %v110 = vld [vmem:[#allocation2 + $0x78] sm:$0xff]
    %v111 = vld [vmem:[#allocation2 + $0x80] sm:$0xff]
    %v112 = vld [vmem:[#allocation2 + $0x88] sm:$0xff]
    %v113 = vld [vmem:[#allocation2 + $0x90] sm:$0xff]
    %v114 = vld [vmem:[#allocation2 + $0x98] sm:$0xff]
    %v115 = vld [vmem:[#allocation2 + $0xa0] sm:$0xff]
    %v116 = vld [vmem:[#allocation2 + $0xa8] sm:$0xff]
    %v117 = vld [vmem:[#allocation2 + $0xb0] sm:$0xff]
    %v118 = vld [vmem:[#allocation2 + $0xb8] sm:$0xff]
    %v119 = vld [vmem:[#allocation2 + $0xc0] sm:$0xff]
    %v120 = vld [vmem:[#allocation2 + $0xc8] sm:$0xff]
    %v121 = vld [vmem:[#allocation2 + $0xd0] sm:$0xff]
    %v122 = vld [vmem:[#allocation2 + $0xd8] sm:$0xff]
    %v123 = vld [vmem:[#allocation2 + $0xe0] sm:$0xff]
    %v124 = vld [vmem:[#allocation2 + $0xe8] sm:$0xff]
    %v125 = vld [vmem:[#allocation2 + $0xf0] sm:$0xff]
    %v126 = vld [vmem:[#allocation2 + $0xf8] sm:$0xff]
    %v127 = vld [vmem:[#allocation2 + $0x100] sm:$0xff]
    %v128 = vld [vmem:[#allocation2 + $0x108] sm:$0xff]
    %v129 = vld [vmem:[#allocation2 + $0x110] sm:$0xff]
    %v130 = vld [vmem:[#allocation2 + $0x118] sm:$0xff]
    %v131 = vld [vmem:[#allocation2 + $0x120] sm:$0xff]
    %v132 = vld [vmem:[#allocation2 + $0x128] sm:$0xff]
    %v133 = vld [vmem:[#allocation2 + $0x130] sm:$0xff]
    %v134 = vld [vmem:[#allocation2 + $0x138] sm:$0xff]
    %v135 = vld [vmem:[#allocation2 + $0x140] sm:$0xff]
    %v136 = vld [vmem:[#allocation2 + $0x148] sm:$0xff]
    %v137 = vld [vmem:[#allocation2 + $0x150] sm:$0xff]
    %v138 = vld [vmem:[#allocation2 + $0x158] sm:$0xff]
    %v139 = vld [vmem:[#allocation2 + $0x160] sm:$0xff]
    %v140 = vld [vmem:[#allocation2 + $0x168] sm:$0xff]
    %v141 = vld [vmem:[#allocation2 + $0x170] sm:$0xff]
    %v142 = vld [vmem:[#allocation2 + $0x178] sm:$0xff]
    %v143 = vld [vmem:[#allocation2 + $0x180] sm:$0xff]
    %v144 = vld [vmem:[#allocation2 + $0x188] sm:$0xff]
    %v145 = vld [vmem:[#allocation2 + $0x190] sm:$0xff]
    %v146 = vld [vmem:[#allocation2 + $0x198] sm:$0xff]
    %v147 = vld [vmem:[#allocation2 + $0x1a0] sm:$0xff]
    %v148 = vld [vmem:[#allocation2 + $0x1a8] sm:$0xff]
    %v149 = vld [vmem:[#allocation2 + $0x1b0] sm:$0xff]
    %v150 = vld [vmem:[#allocation2 + $0x1b8] sm:$0xff]
    %v151 = vld [vmem:[#allocation2 + $0x1c0] sm:$0xff]
    %v152 = vld [vmem:[#allocation2 + $0x1c8] sm:$0xff]
    %v153 = vld [vmem:[#allocation2 + $0x1d0] sm:$0xff]
    %v154 = vld [vmem:[#allocation2 + $0x1d8] sm:$0xff]
    %v155 = vld [vmem:[#allocation2 + $0x1e0] sm:$0xff]
    %v156 = vld [vmem:[#allocation2 + $0x1e8] sm:$0xff]
    %v157 = vld [vmem:[#allocation2 + $0x1f0] sm:$0xff]
    %v158 = vld [vmem:[#allocation2 + $0x1f8] sm:$0xff]
    %v159 = vld [vmem:[#allocation2 + $0x200] sm:$0xff]
    %v160 = vld [vmem:[#allocation2 + $0x208] sm:$0xff]
    %v161 = vld [vmem:[#allocation2 + $0x210] sm:$0xff]
    %v162 = vld [vmem:[#allocation2 + $0x218] sm:$0xff]
    %v163 = vld [vmem:[#allocation2 + $0x220] sm:$0xff]
    %v164 = vld [vmem:[#allocation2 + $0x228] sm:$0xff]
    %v165 = vld [vmem:[#allocation2 + $0x230] sm:$0xff]
    %v166 = vld [vmem:[#allocation2 + $0x238] sm:$0xff]
    %v167 = vld [vmem:[#allocation2 + $0x240] sm:$0xff]
    %v168 = vld [vmem:[#allocation2 + $0x248] sm:$0xff]
    %v169 = vld [vmem:[#allocation2 + $0x250] sm:$0xff]
    %v170 = vld [vmem:[#allocation2 + $0x258] sm:$0xff]
    %v171 = vld [vmem:[#allocation2 + $0x260] sm:$0xff]
    %v172 = vld [vmem:[#allocation2 + $0x268] sm:$0xff]
    %v173 = vld [vmem:[#allocation2 + $0x270] sm:$0xff]
    %v174 = vld [vmem:[#allocation2 + $0x278] sm:$0xff]
    %v175 = vld [vmem:[#allocation2 + $0x280] sm:$0xff]
    %v176 = vld [vmem:[#allocation2 + $0x288] sm:$0xff]
    %v177 = vld [vmem:[#allocation2 + $0x290] sm:$0xff]
    %v178 = vld [vmem:[#allocation2 + $0x298] sm:$0xff]
    %v179 = vld [vmem:[#allocation2 + $0x2a0] sm:$0xff]
    %v180 = vld [vmem:[#allocation2 + $0x2a8] sm:$0xff]
    %v181 = vld [vmem:[#allocation2 + $0x2b0] sm:$0xff]
    %v182 = vld [vmem:[#allocation2 + $0x2b8] sm:$0xff]
    %v183 = vld [vmem:[#allocation2 + $0x2c0] sm:$0xff]
    %v184 = vld [vmem:[#allocation2 + $0x2c8] sm:$0xff]
    %v185 = vld [vmem:[#allocation2 + $0x2d0] sm:$0xff]
    %v186 = vld [vmem:[#allocation2 + $0x2d8] sm:$0xff]
    %v187 = vld [vmem:[#allocation2 + $0x2e0] sm:$0xff]
    %v188 = vld [vmem:[#allocation2 + $0x2e8] sm:$0xff]
    %v189 = vld [vmem:[#allocation2 + $0x2f0] sm:$0xff]
    %v190 = vld [vmem:[#allocation2 + $0x2f8] sm:$0xff]
    %v191 = vld [vmem:[#allocation2 + $0x300] sm:$0xff]
    %v192 = vld [vmem:[#allocation2 + $0x308] sm:$0xff]
    %v193 = vld [vmem:[#allocation2 + $0x310] sm:$0xff]
    %v194 = vld [vmem:[#allocation2 + $0x318] sm:$0xff]
    %v195 = vld [vmem:[#allocation2 + $0x320] sm:$0xff]
    %v196 = vld [vmem:[#allocation2 + $0x328] sm:$0xff]
    %v197 = vld [vmem:[#allocation2 + $0x330] sm:$0xff]
    %v198 = vld [vmem:[#allocation2 + $0x338] sm:$0xff]
    %v199 = vld [vmem:[#allocation2 + $0x340] sm:$0xff]
    %v200 = vld [vmem:[#allocation2 + $0x348] sm:$0xff]
    %v201 = vld [vmem:[#allocation2 + $0x350] sm:$0xff]
    %v202 = vld [vmem:[#allocation2 + $0x358] sm:$0xff]
    %v203 = vld [vmem:[#allocation2 + $0x360] sm:$0xff]
    %v204 = vld [vmem:[#allocation2 + $0x368] sm:$0xff]
    %v205 = vld [vmem:[#allocation2 + $0x370] sm:$0xff]
    %v206 = vld [vmem:[#allocation2 + $0x378] sm:$0xff]
    %v207 = vld [vmem:[#allocation2 + $0x380] sm:$0xff]
    %v208 = vld [vmem:[#allocation2 + $0x388] sm:$0xff]
    %v209 = vld [vmem:[#allocation2 + $0x390] sm:$0xff]
    %v210 = vld [vmem:[#allocation2 + $0x398] sm:$0xff]
    %v211 = vld [vmem:[#allocation2 + $0x3a0] sm:$0xff]
    %v212 = vld [vmem:[#allocation2 + $0x3a8] sm:$0xff]
    %v213 = vld [vmem:[#allocation2 + $0x3b0] sm:$0xff]
    %v214 = vld [vmem:[#allocation2 + $0x3b8] sm:$0xff]
    %v215 = vld [vmem:[#allocation2 + $0x3c0] sm:$0xff]
    %v216 = vld [vmem:[#allocation2 + $0x3c8] sm:$0xff]
    %v217 = vld [vmem:[#allocation2 + $0x3d0] sm:$0xff]
    %v218 = vld [vmem:[#allocation2 + $0x3d8] sm:$0xff]
    %v219 = vld [vmem:[#allocation2 + $0x3e0] sm:$0xff]
    %v220 = vld [vmem:[#allocation2 + $0x3e8] sm:$0xff]
    %v221 = vld [vmem:[#allocation2 + $0x3f0] sm:$0xff]
    %v222 = vld [vmem:[#allocation2 + $0x3f8] sm:$0xff]
    %v223 = vld [vmem:[#allocation2 + $0x400] sm:$0xff]
    %v224 = vld [vmem:[#allocation2 + $0x408] sm:$0xff]
    %v225 = vld [vmem:[#allocation2 + $0x410] sm:$0xff]
    %v226 = vld [vmem:[#allocation2 + $0x418] sm:$0xff]
    %v227 = vld [vmem:[#allocation2 + $0x420] sm:$0xff]
    %v228 = vld [vmem:[#allocation2 + $0x428] sm:$0xff]
    %v229 = vld [vmem:[#allocation2 + $0x430] sm:$0xff]
    %v230 = vld [vmem:[#allocation2 + $0x438] sm:$0xff]
    %v231 = vld [vmem:[#allocation2 + $0x440] sm:$0xff]
    %v232 = vld [vmem:[#allocation2 + $0x448] sm:$0xff]
    %v233 = vld [vmem:[#allocation2 + $0x450] sm:$0xff]
    %v234 = vld [vmem:[#allocation2 + $0x458] sm:$0xff]
    %v235 = vld [vmem:[#allocation2 + $0x460] sm:$0xff]
    %v236 = vld [vmem:[#allocation2 + $0x468] sm:$0xff]
    %v237 = vld [vmem:[#allocation2 + $0x470] sm:$0xff]
    %v238 = vld [vmem:[#allocation2 + $0x478] sm:$0xff]
    %v239 = vld [vmem:[#allocation2 + $0x480] sm:$0xff]
    %v240 = vld [vmem:[#allocation2 + $0x488] sm:$0xff]
    %v241 = vld [vmem:[#allocation2 + $0x490] sm:$0xff]
    %v242 = vld [vmem:[#allocation2 + $0x498] sm:$0xff]
    %v243 = vld [vmem:[#allocation2 + $0x4a0] sm:$0xff]
    %v244 = vld [vmem:[#allocation2 + $0x4a8] sm:$0xff]
    %v245 = vld [vmem:[#allocation2 + $0x4b0] sm:$0xff]
    %v246 = vld [vmem:[#allocation2 + $0x4b8] sm:$0xff]
    %v247 = vld [vmem:[#allocation2 + $0x4c0] sm:$0xff]
    %v248 = vld [vmem:[#allocation2 + $0x4c8] sm:$0xff]
    %v249 = vld [vmem:[#allocation2 + $0x4d0] sm:$0xff]
    %v250 = vld [vmem:[#allocation2 + $0x4d8] sm:$0xff]
    %v251 = vld [vmem:[#allocation2 + $0x4e0] sm:$0xff]
    %v252 = vld [vmem:[#allocation2 + $0x4e8] sm:$0xff]
    %v253 = vld [vmem:[#allocation2 + $0x4f0] sm:$0xff]
    %v254 = vld [vmem:[#allocation2 + $0x4f8] sm:$0xff]
    %v255 = vld [vmem:[#allocation2 + $0x500] sm:$0xff]
    %v256 = vld [vmem:[#allocation2 + $0x508] sm:$0xff]
    %v257 = vld [vmem:[#allocation2 + $0x510] sm:$0xff]
    %v258 = vld [vmem:[#allocation2 + $0x518] sm:$0xff]
    %v259 = vld [vmem:[#allocation2 + $0x520] sm:$0xff]
    %v260 = vld [vmem:[#allocation2 + $0x528] sm:$0xff]
    %v261 = vld [vmem:[#allocation2 + $0x530] sm:$0xff]
    %v262 = vld [vmem:[#allocation2 + $0x538] sm:$0xff]
    %v263 = vld [vmem:[#allocation2 + $0x540] sm:$0xff]
    %v264 = vld [vmem:[#allocation2 + $0x548] sm:$0xff]
    %v265 = vld [vmem:[#allocation2 + $0x550] sm:$0xff]
    %v266 = vld [vmem:[#allocation2 + $0x558] sm:$0xff]
    %v267 = vld [vmem:[#allocation2 + $0x560] sm:$0xff]
    %v268 = vld [vmem:[#allocation2 + $0x568] sm:$0xff]
    %v269 = vld [vmem:[#allocation2 + $0x570] sm:$0xff]
    %v270 = vld [vmem:[#allocation2 + $0x578] sm:$0xff]
    %v271 = vld [vmem:[#allocation2 + $0x580] sm:$0xff]
    %v272 = vld [vmem:[#allocation2 + $0x588] sm:$0xff]
    %v273 = vld [vmem:[#allocation2 + $0x590] sm:$0xff]
    %v274 = vld [vmem:[#allocation2 + $0x598] sm:$0xff]
    %v275 = vld [vmem:[#allocation2 + $0x5a0] sm:$0xff]
    %v276 = vld [vmem:[#allocation2 + $0x5a8] sm:$0xff]
    %v277 = vld [vmem:[#allocation2 + $0x5b0] sm:$0xff]
    %v278 = vld [vmem:[#allocation2 + $0x5b8] sm:$0xff]
    %v279 = vld [vmem:[#allocation2 + $0x5c0] sm:$0xff]
    %v280 = vld [vmem:[#allocation2 + $0x5c8] sm:$0xff]
    %v281 = vld [vmem:[#allocation2 + $0x5d0] sm:$0xff]
    %v282 = vld [vmem:[#allocation2 + $0x5d8] sm:$0xff]
    %v283 = vld [vmem:[#allocation2 + $0x5e0] sm:$0xff]
    %v284 = vld [vmem:[#allocation2 + $0x5e8] sm:$0xff]
    %v285 = vld [vmem:[#allocation2 + $0x5f0] sm:$0xff]
    %v286 = vld [vmem:[#allocation2 + $0x5f8] sm:$0xff]
    %v287 = vld [vmem:[#allocation2 + $0x600] sm:$0xff]
    %v288 = vld [vmem:[#allocation2 + $0x608] sm:$0xff]
    %v289 = vld [vmem:[#allocation2 + $0x610] sm:$0xff]
    %v290 = vld [vmem:[#allocation2 + $0x618] sm:$0xff]
    %v291 = vld [vmem:[#allocation2 + $0x620] sm:$0xff]
    %v292 = vld [vmem:[#allocation2 + $0x628] sm:$0xff]
    %v293 = vld [vmem:[#allocation2 + $0x630] sm:$0xff]
    %v294 = vld [vmem:[#allocation2 + $0x638] sm:$0xff]
    %v295 = vld [vmem:[#allocation2 + $0x640] sm:$0xff]
    %v296 = vld [vmem:[#allocation2 + $0x648] sm:$0xff]
    %v297 = vld [vmem:[#allocation2 + $0x650] sm:$0xff]
    %v298 = vld [vmem:[#allocation2 + $0x658] sm:$0xff]
    %v299 = vld [vmem:[#allocation2 + $0x660] sm:$0xff]
    %v300 = vld [vmem:[#allocation2 + $0x668] sm:$0xff]
    %v301 = vld [vmem:[#allocation2 + $0x670] sm:$0xff]
    %v302 = vld [vmem:[#allocation2 + $0x678] sm:$0xff]
    %v303 = vld [vmem:[#allocation2 + $0x680] sm:$0xff]
    %v304 = vld [vmem:[#allocation2 + $0x688] sm:$0xff]
    %v305 = vld [vmem:[#allocation2 + $0x690] sm:$0xff]
    %v306 = vld [vmem:[#allocation2 + $0x698] sm:$0xff]
    %v307 = vld [vmem:[#allocation2 + $0x6a0] sm:$0xff]
    %v308 = vld [vmem:[#allocation2 + $0x6a8] sm:$0xff]
    %v309 = vld [vmem:[#allocation2 + $0x6b0] sm:$0xff]
    %v310 = vld [vmem:[#allocation2 + $0x6b8] sm:$0xff]
    %v311 = vld [vmem:[#allocation2 + $0x6c0] sm:$0xff]
    %v312 = vld [vmem:[#allocation2 + $0x6c8] sm:$0xff]
    %v313 = vld [vmem:[#allocation2 + $0x6d0] sm:$0xff]
    %v314 = vld [vmem:[#allocation2 + $0x6d8] sm:$0xff]
    %v315 = vld [vmem:[#allocation2 + $0x6e0] sm:$0xff]
    %v316 = vld [vmem:[#allocation2 + $0x6e8] sm:$0xff]
    %v317 = vld [vmem:[#allocation2 + $0x6f0] sm:$0xff]
    %v318 = vld [vmem:[#allocation2 + $0x6f8] sm:$0xff]
    %v319 = vld [vmem:[#allocation2 + $0x700] sm:$0xff]
    %v320 = vld [vmem:[#allocation2 + $0x708] sm:$0xff]
    %v321 = vld [vmem:[#allocation2 + $0x710] sm:$0xff]
    %v322 = vld [vmem:[#allocation2 + $0x718] sm:$0xff]
    %v323 = vld [vmem:[#allocation2 + $0x720] sm:$0xff]
    %v324 = vld [vmem:[#allocation2 + $0x728] sm:$0xff]
    %v325 = vld [vmem:[#allocation2 + $0x730] sm:$0xff]
    %v326 = vld [vmem:[#allocation2 + $0x738] sm:$0xff]
    %v327 = vld [vmem:[#allocation2 + $0x740] sm:$0xff]
    %v328 = vld [vmem:[#allocation2 + $0x748] sm:$0xff]
    %v329 = vld [vmem:[#allocation2 + $0x750] sm:$0xff]
    %v330 = vld [vmem:[#allocation2 + $0x758] sm:$0xff]
    %v331 = vld [vmem:[#allocation2 + $0x760] sm:$0xff]
    %v332 = vld [vmem:[#allocation2 + $0x768] sm:$0xff]
    %v333 = vld [vmem:[#allocation2 + $0x770] sm:$0xff]
    %v334 = vld [vmem:[#allocation2 + $0x778] sm:$0xff]
    %v335 = vld [vmem:[#allocation2 + $0x780] sm:$0xff]
    %v336 = vld [vmem:[#allocation2 + $0x788] sm:$0xff]
    %v337 = vld [vmem:[#allocation2 + $0x790] sm:$0xff]
    %v338 = vld [vmem:[#allocation2 + $0x798] sm:$0xff]
    %v339 = vld [vmem:[#allocation2 + $0x7a0] sm:$0xff]
    %v340 = vld [vmem:[#allocation2 + $0x7a8] sm:$0xff]
    %v341 = vld [vmem:[#allocation2 + $0x7b0] sm:$0xff]
    %v342 = vld [vmem:[#allocation2 + $0x7b8] sm:$0xff]
    %v343 = vld [vmem:[#allocation2 + $0x7c0] sm:$0xff]
    %v344 = vld [vmem:[#allocation2 + $0x7c8] sm:$0xff]
    %v345 = vld [vmem:[#allocation2 + $0x7d0] sm:$0xff]
    %v346 = vld [vmem:[#allocation2 + $0x7d8] sm:$0xff]
    %v347 = vld [vmem:[#allocation2 + $0x7e0] sm:$0xff]
    %v348 = vld [vmem:[#allocation2 + $0x7e8] sm:$0xff]
    %v349 = vld [vmem:[#allocation2 + $0x7f0] sm:$0xff]
    %v350 = vld [vmem:[#allocation2 + $0x7f8] sm:$0xff]
    %v351 = vld [vmem:[#allocation2 + $0x800] sm:$0xff]
    %v352 = vld [vmem:[#allocation2 + $0x808] sm:$0xff]
    %v353 = vld [vmem:[#allocation2 + $0x810] sm:$0xff]
    %v354 = vld [vmem:[#allocation2 + $0x818] sm:$0xff]
    %v355 = vld [vmem:[#allocation2 + $0x820] sm:$0xff]
    %v356 = vld [vmem:[#allocation2 + $0x828] sm:$0xff]
    %v357 = vld [vmem:[#allocation2 + $0x830] sm:$0xff]
    %v358 = vld [vmem:[#allocation2 + $0x838] sm:$0xff]
    %v359 = vld [vmem:[#allocation2 + $0x840] sm:$0xff]
    %v360 = vld [vmem:[#allocation2 + $0x848] sm:$0xff]
    %v361 = vld [vmem:[#allocation2 + $0x850] sm:$0xff]
    %v362 = vld [vmem:[#allocation2 + $0x858] sm:$0xff]
    %v363 = vld [vmem:[#allocation2 + $0x860] sm:$0xff]
    %v364 = vld [vmem:[#allocation2 + $0x868] sm:$0xff]
    %v365 = vld [vmem:[#allocation2 + $0x870] sm:$0xff]
    %v366 = vld [vmem:[#allocation2 + $0x878] sm:$0xff]
    %v367 = vld [vmem:[#allocation2 + $0x880] sm:$0xff]
    %v368 = vld [vmem:[#allocation2 + $0x888] sm:$0xff]
    %v369 = vld [vmem:[#allocation2 + $0x890] sm:$0xff]
    %v370 = vld [vmem:[#allocation2 + $0x898] sm:$0xff]
    %v371 = vld [vmem:[#allocation2 + $0x8a0] sm:$0xff]
    %v372 = vld [vmem:[#allocation2 + $0x8a8] sm:$0xff]
    %v373 = vld [vmem:[#allocation2 + $0x8b0] sm:$0xff]
    %v374 = vld [vmem:[#allocation2 + $0x8b8] sm:$0xff]
    %v375 = vld [vmem:[#allocation2 + $0x8c0] sm:$0xff]
    %v376 = vld [vmem:[#allocation2 + $0x8c8] sm:$0xff]
    %v377 = vld [vmem:[#allocation2 + $0x8d0] sm:$0xff]
    %v378 = vld [vmem:[#allocation2 + $0x8d8] sm:$0xff]
    %v379 = vld [vmem:[#allocation2 + $0x8e0] sm:$0xff]
    %v380 = vld [vmem:[#allocation2 + $0x8e8] sm:$0xff]
    %v381 = vld [vmem:[#allocation2 + $0x8f0] sm:$0xff]
    %v382 = vld [vmem:[#allocation2 + $0x8f8] sm:$0xff]
    %v383 = vld [vmem:[#allocation2 + $0x900] sm:$0xff]
    %v384 = vld [vmem:[#allocation2 + $0x908] sm:$0xff]
    %v385 = vld [vmem:[#allocation2 + $0x910] sm:$0xff]
    %v386 = vld [vmem:[#allocation2 + $0x918] sm:$0xff]
    %v387 = vld [vmem:[#allocation2 + $0x920] sm:$0xff]
    %v388 = vld [vmem:[#allocation2 + $0x928] sm:$0xff]
    %v389 = vld [vmem:[#allocation2 + $0x930] sm:$0xff]
    %v390 = vld [vmem:[#allocation2 + $0x938] sm:$0xff]
    %v391 = vld [vmem:[#allocation2 + $0x940] sm:$0xff]
    %v392 = vld [vmem:[#allocation2 + $0x948] sm:$0xff]
    %v393 = vld [vmem:[#allocation2 + $0x950] sm:$0xff]
    %v394 = vld [vmem:[#allocation2 + $0x958] sm:$0xff]
    %v395 = vld [vmem:[#allocation2 + $0x960] sm:$0xff]
    %v396 = vld [vmem:[#allocation2 + $0x968] sm:$0xff]
    %v397 = vld [vmem:[#allocation2 + $0x970] sm:$0xff]
    %v398 = vld [vmem:[#allocation2 + $0x978] sm:$0xff]
    %v399 = vld [vmem:[#allocation2 + $0x980] sm:$0xff]
    %v400 = vld [vmem:[#allocation2 + $0x988] sm:$0xff]
    %v401 = vld [vmem:[#allocation2 + $0x990] sm:$0xff]
    %v402 = vld [vmem:[#allocation2 + $0x998] sm:$0xff]
    %v403 = vld [vmem:[#allocation2 + $0x9a0] sm:$0xff]
    %v404 = vld [vmem:[#allocation2 + $0x9a8] sm:$0xff]
    %v405 = vld [vmem:[#allocation2 + $0x9b0] sm:$0xff]
    %v406 = vld [vmem:[#allocation2 + $0x9b8] sm:$0xff]
    %v407 = vld [vmem:[#allocation2 + $0x9c0] sm:$0xff]
    %v408 = vld [vmem:[#allocation2 + $0x9c8] sm:$0xff]
    %v409 = vld [vmem:[#allocation2 + $0x9d0] sm:$0xff]
    %v410 = vld [vmem:[#allocation2 + $0x9d8] sm:$0xff]
    %v411 = vld [vmem:[#allocation2 + $0x9e0] sm:$0xff]
    %v412 = vld [vmem:[#allocation2 + $0x9e8] sm:$0xff]
    %v413 = vld [vmem:[#allocation2 + $0x9f0] sm:$0xff]
    %v414 = vld [vmem:[#allocation2 + $0x9f8] sm:$0xff]
    %v415 = vld [vmem:[#allocation2 + $0xa00] sm:$0xff]
    %v416 = vld [vmem:[#allocation2 + $0xa08] sm:$0xff]
    %v417 = vld [vmem:[#allocation2 + $0xa10] sm:$0xff]
    %v418 = vld [vmem:[#allocation2 + $0xa18] sm:$0xff]
    %v419 = vld [vmem:[#allocation2 + $0xa20] sm:$0xff]
    %v420 = vld [vmem:[#allocation2 + $0xa28] sm:$0xff]
    %v421 = vld [vmem:[#allocation2 + $0xa30] sm:$0xff]
    %v422 = vld [vmem:[#allocation2 + $0xa38] sm:$0xff]
    %v423 = vld [vmem:[#allocation2 + $0xa40] sm:$0xff]
    %v424 = vld [vmem:[#allocation2 + $0xa48] sm:$0xff]
    %v425 = vld [vmem:[#allocation2 + $0xa50] sm:$0xff]
    %v426 = vld [vmem:[#allocation2 + $0xa58] sm:$0xff]
    %v427 = vld [vmem:[#allocation2 + $0xa60] sm:$0xff]
    %v428 = vld [vmem:[#allocation2 + $0xa68] sm:$0xff]
    %v429 = vld [vmem:[#allocation2 + $0xa70] sm:$0xff]
    %v430 = vld [vmem:[#allocation2 + $0xa78] sm:$0xff]
    %v431 = vld [vmem:[#allocation2 + $0xa80] sm:$0xff]
    %v432 = vld [vmem:[#allocation2 + $0xa88] sm:$0xff]
    %v433 = vld [vmem:[#allocation2 + $0xa90] sm:$0xff]
    %v434 = vld [vmem:[#allocation2 + $0xa98] sm:$0xff]
    %v435 = vld [vmem:[#allocation2 + $0xaa0] sm:$0xff]
    %v436 = vld [vmem:[#allocation2 + $0xaa8] sm:$0xff]
    %v437 = vld [vmem:[#allocation2 + $0xab0] sm:$0xff]
    %v438 = vld [vmem:[#allocation2 + $0xab8] sm:$0xff]
    %v439 = vld [vmem:[#allocation2 + $0xac0] sm:$0xff]
    %v440 = vld [vmem:[#allocation2 + $0xac8] sm:$0xff]
    %v441 = vld [vmem:[#allocation2 + $0xad0] sm:$0xff]
    %v442 = vld [vmem:[#allocation2 + $0xad8] sm:$0xff]
    %v443 = vld [vmem:[#allocation2 + $0xae0] sm:$0xff]
    %v444 = vld [vmem:[#allocation2 + $0xae8] sm:$0xff]
    %v445 = vld [vmem:[#allocation2 + $0xaf0] sm:$0xff]
    %v446 = vld [vmem:[#allocation2 + $0xaf8] sm:$0xff]
    %v447 = vld [vmem:[#allocation2 + $0xb00] sm:$0xff]
    %v448 = vld [vmem:[#allocation2 + $0xb08] sm:$0xff]
    %v449 = vld [vmem:[#allocation2 + $0xb10] sm:$0xff]
    %v450 = vld [vmem:[#allocation2 + $0xb18] sm:$0xff]
    %v451 = vld [vmem:[#allocation2 + $0xb20] sm:$0xff]
    %v452 = vld [vmem:[#allocation2 + $0xb28] sm:$0xff]
    %v453 = vld [vmem:[#allocation2 + $0xb30] sm:$0xff]
    %v454 = vld [vmem:[#allocation2 + $0xb38] sm:$0xff]
    %v455 = vld [vmem:[#allocation2 + $0xb40] sm:$0xff]
    %v456 = vld [vmem:[#allocation2 + $0xb48] sm:$0xff]
    %v457 = vld [vmem:[#allocation2 + $0xb50] sm:$0xff]
    %v458 = vld [vmem:[#allocation2 + $0xb58] sm:$0xff]
    %v459 = vld [vmem:[#allocation2 + $0xb60] sm:$0xff]
    %v460 = vld [vmem:[#allocation2 + $0xb68] sm:$0xff]
    %v461 = vld [vmem:[#allocation2 + $0xb70] sm:$0xff]
    %v462 = vld [vmem:[#allocation2 + $0xb78] sm:$0xff]
    %v463 = vld [vmem:[#allocation2 + $0xb80] sm:$0xff]
    %v464 = vld [vmem:[#allocation2 + $0xb88] sm:$0xff]
    %v465 = vld [vmem:[#allocation2 + $0xb90] sm:$0xff]
    %v466 = vld [vmem:[#allocation2 + $0xb98] sm:$0xff]
    %v467 = vld [vmem:[#allocation2 + $0xba0] sm:$0xff]
    %v468 = vld [vmem:[#allocation2 + $0xba8] sm:$0xff]
    %v469 = vld [vmem:[#allocation2 + $0xbb0] sm:$0xff]
    %v470 = vld [vmem:[#allocation2 + $0xbb8] sm:$0xff]
    %v471 = vld [vmem:[#allocation2 + $0xbc0] sm:$0xff]
    %v472 = vld [vmem:[#allocation2 + $0xbc8] sm:$0xff]
    %v473 = vld [vmem:[#allocation2 + $0xbd0] sm:$0xff]
    %v474 = vld [vmem:[#allocation2 + $0xbd8] sm:$0xff]
    %v475 = vld [vmem:[#allocation2 + $0xbe0] sm:$0xff]
    %v476 = vld [vmem:[#allocation2 + $0xbe8] sm:$0xff]
    %v477 = vld [vmem:[#allocation2 + $0xbf0] sm:$0xff]
    %v478 = vld [vmem:[#allocation2 + $0xbf8] sm:$0xff]
    %v479 = vld [vmem:[#allocation2 + $0xc00] sm:$0xff]
    %v480 = vld [vmem:[#allocation2 + $0xc08] sm:$0xff]
    %v481 = vld [vmem:[#allocation2 + $0xc10] sm:$0xff]
    %v482 = vld [vmem:[#allocation2 + $0xc18] sm:$0xff]
    %v483 = vld [vmem:[#allocation2 + $0xc20] sm:$0xff]
    %v484 = vld [vmem:[#allocation2 + $0xc28] sm:$0xff]
    %v485 = vld [vmem:[#allocation2 + $0xc30] sm:$0xff]
    %v486 = vld [vmem:[#allocation2 + $0xc38] sm:$0xff]
    %vm487 = vcmask 130048
    %v489 = vsel %vm487, %v94, 0
    %491 = vmatprep.subr.mxu0 %v96
    %492 = vmatpush1.msra.mxu0 %v95
    %493 = vmatprep.subr.mxu0 %v100
    %494 = vmatpush1.msra.mxu0 %v99
    %495 = vmatprep.subr.mxu0 %v104
    %496 = vmatpush1.msra.mxu0 %v103
    %497 = vmatprep.subr.mxu0 %v108
    %498 = vmatpush1.msra.mxu0 %v107
    %499 = vmatprep.subr.mxu0 %v112
    %500 = vmatpush1.msra.mxu0 %v111
    %501 = vmatprep.subr.mxu0 %v116
    %502 = vmatpush1.msra.mxu0 %v115
    %503 = vmatprep.subr.mxu0 %v120
    %504 = vmatpush1.msra.mxu0 %v119
    %505 = vmatprep.subr.mxu0 %v124
    %506 = vmatpush1.msra.mxu0 %v123
    %507 = vmatprep.subr.mxu0 %v128
    %508 = vmatpush1.msra.mxu0 %v127
    %509 = vmatprep.subr.mxu0 %v132
    %510 = vmatpush1.msra.mxu0 %v131
    %511 = vmatprep.subr.mxu0 %v136
    %512 = vmatpush1.msra.mxu0 %v135
    %513 = vmatprep.subr.mxu0 %v140
    %514 = vmatpush1.msra.mxu0 %v139
    %515 = vmatprep.subr.mxu0 %v144
    %516 = vmatpush1.msra.mxu0 %v143
    %517 = vmatprep.subr.mxu0 %v148
    %518 = vmatpush1.msra.mxu0 %v147
    %519 = vmatprep.subr.mxu0 %v152
    %520 = vmatpush1.msra.mxu0 %v151
    %521 = vmatprep.subr.mxu0 %v156
    %522 = vmatpush1.msra.mxu0 %v155
    %523 = vmatprep.subr.mxu0 %v160
    %524 = vmatpush1.msra.mxu0 %v159
    %525 = vmatprep.subr.mxu0 %v164
    %526 = vmatpush1.msra.mxu0 %v163
    %527 = vmatprep.subr.mxu0 %v168
    %528 = vmatpush1.msra.mxu0 %v167
    %529 = vmatprep.subr.mxu0 %v172
    %530 = vmatpush1.msra.mxu0 %v171
    %531 = vmatprep.subr.mxu0 %v176
    %532 = vmatpush1.msra.mxu0 %v175
    %533 = vmatprep.subr.mxu0 %v180
    %534 = vmatpush1.msra.mxu0 %v179
    %535 = vmatprep.subr.mxu0 %v184
    %536 = vmatpush1.msra.mxu0 %v183
    %537 = vmatprep.subr.mxu0 %v188
    %538 = vmatpush1.msra.mxu0 %v187
    %539 = vmatprep.subr.mxu0 %v192
    %540 = vmatpush1.msra.mxu0 %v191
    %541 = vmatprep.subr.mxu0 %v196
    %542 = vmatpush1.msra.mxu0 %v195
    %543 = vmatprep.subr.mxu0 %v200
    %544 = vmatpush1.msra.mxu0 %v199
    %545 = vmatprep.subr.mxu0 %v204
    %546 = vmatpush1.msra.mxu0 %v203
    %547 = vmatprep.subr.mxu0 %v208
    %548 = vmatpush1.msra.mxu0 %v207
    %549 = vmatprep.subr.mxu0 %v212
    %550 = vmatpush1.msra.mxu0 %v211
    %551 = vmatprep.subr.mxu0 %v216
    %552 = vmatpush1.msra.mxu0 %v215
    %553 = vmatprep.subr.mxu0 %v220
    %554 = vmatpush1.msra.mxu0 %v219
    %555 = vmatprep.mubr.f32.mxu0 %v89
    %556 = vmatmul.mubr.f32.gmra.mrb[0].mxu0 %v88
    %v557 = vpop.f32.mrb[0].mxu0
    %v558 = vadd.f32 0.0, %v557
    %v559 = vpop.f32.mrb[0].mxu0
    %v560 = vadd.f32 0.0, %v559
    %561 = vdwg.mxu0
    %562 = vmatprep.subr.mxu0 %v224
    %563 = vmatpush1.msra.mxu0 %v223
    %564 = vmatprep.subr.mxu0 %v228
    %565 = vmatpush1.msra.mxu0 %v227
    %566 = vmatprep.subr.mxu0 %v232
    %567 = vmatpush1.msra.mxu0 %v231
    %568 = vmatprep.subr.mxu0 %v236
    %569 = vmatpush1.msra.mxu0 %v235
    %570 = vmatprep.subr.mxu0 %v240
    %571 = vmatpush1.msra.mxu0 %v239
    %572 = vmatprep.subr.mxu0 %v244
    %573 = vmatpush1.msra.mxu0 %v243
    %574 = vmatprep.subr.mxu0 %v248
    %575 = vmatpush1.msra.mxu0 %v247
    %576 = vmatprep.subr.mxu0 %v252
    %577 = vmatpush1.msra.mxu0 %v251
    %578 = vmatprep.subr.mxu0 %v256
    %579 = vmatpush1.msra.mxu0 %v255
    %580 = vmatprep.subr.mxu0 %v260
    %581 = vmatpush1.msra.mxu0 %v259
    %582 = vmatprep.subr.mxu0 %v264
    %583 = vmatpush1.msra.mxu0 %v263
    %584 = vmatprep.subr.mxu0 %v268
    %585 = vmatpush1.msra.mxu0 %v267
    %586 = vmatprep.subr.mxu0 %v272
    %587 = vmatpush1.msra.mxu0 %v271
    %588 = vmatprep.subr.mxu0 %v276
    %589 = vmatpush1.msra.mxu0 %v275
    %590 = vmatprep.subr.mxu0 %v280
    %591 = vmatpush1.msra.mxu0 %v279
    %592 = vmatprep.subr.mxu0 %v284
    %593 = vmatpush1.msra.mxu0 %v283
    %594 = vmatprep.subr.mxu0 %v288
    %595 = vmatpush1.msra.mxu0 %v287
    %596 = vmatprep.subr.mxu0 %v292
    %597 = vmatpush1.msra.mxu0 %v291
    %598 = vmatprep.subr.mxu0 %v296
    %599 = vmatpush1.msra.mxu0 %v295
    %600 = vmatprep.subr.mxu0 %v300
    %601 = vmatpush1.msra.mxu0 %v299
    %602 = vmatprep.subr.mxu0 %v304
    %603 = vmatpush1.msra.mxu0 %v303
    %604 = vmatprep.subr.mxu0 %v308
    %605 = vmatpush1.msra.mxu0 %v307
    %606 = vmatprep.subr.mxu0 %v312
    %607 = vmatpush1.msra.mxu0 %v311
    %608 = vmatprep.subr.mxu0 %v316
    %609 = vmatpush1.msra.mxu0 %v315
    %610 = vmatprep.subr.mxu0 %v320
    %611 = vmatpush1.msra.mxu0 %v319
    %612 = vmatprep.subr.mxu0 %v324
    %613 = vmatpush1.msra.mxu0 %v323
    %614 = vmatprep.subr.mxu0 %v328
    %615 = vmatpush1.msra.mxu0 %v327
    %616 = vmatprep.subr.mxu0 %v332
    %617 = vmatpush1.msra.mxu0 %v331
    %618 = vmatprep.subr.mxu0 %v336
    %619 = vmatpush1.msra.mxu0 %v335
    %620 = vmatprep.subr.mxu0 %v340
    %621 = vmatpush1.msra.mxu0 %v339
    %622 = vmatprep.subr.mxu0 %v344
    %623 = vmatpush1.msra.mxu0 %v343
    %624 = vmatprep.subr.mxu0 %v348
    %625 = vmatpush1.msra.mxu0 %v347
    %626 = vmatprep.mubr.f32.mxu0 %v91
    %627 = vmatmul.mubr.f32.gmra.mrb[0].mxu0 %v90
    %v628 = vpop.f32.mrb[0].mxu0
    %v629 = vadd.f32 %v558, %v628
    %v630 = vpop.f32.mrb[0].mxu0
    %v631 = vadd.f32 %v560, %v630
    %632 = vdwg.mxu0
    %633 = vmatprep.subr.mxu0 %v352
    %634 = vmatpush1.msra.mxu0 %v351
    %635 = vmatprep.subr.mxu0 %v356
    %636 = vmatpush1.msra.mxu0 %v355
    %637 = vmatprep.subr.mxu0 %v360
    %638 = vmatpush1.msra.mxu0 %v359
    %639 = vmatprep.subr.mxu0 %v364
    %640 = vmatpush1.msra.mxu0 %v363
    %641 = vmatprep.subr.mxu0 %v368
    %642 = vmatpush1.msra.mxu0 %v367
    %643 = vmatprep.subr.mxu0 %v372
    %644 = vmatpush1.msra.mxu0 %v371
    %645 = vmatprep.subr.mxu0 %v376
    %646 = vmatpush1.msra.mxu0 %v375
    %647 = vmatprep.subr.mxu0 %v380
    %648 = vmatpush1.msra.mxu0 %v379
    %649 = vmatprep.subr.mxu0 %v384
    %650 = vmatpush1.msra.mxu0 %v383
    %651 = vmatprep.subr.mxu0 %v388
    %652 = vmatpush1.msra.mxu0 %v387
    %653 = vmatprep.subr.mxu0 %v392
    %654 = vmatpush1.msra.mxu0 %v391
    %655 = vmatprep.subr.mxu0 %v396
    %656 = vmatpush1.msra.mxu0 %v395
    %657 = vmatprep.subr.mxu0 %v400
    %658 = vmatpush1.msra.mxu0 %v399
    %659 = vmatprep.subr.mxu0 %v404
    %660 = vmatpush1.msra.mxu0 %v403
    %661 = vmatprep.subr.mxu0 %v408
    %662 = vmatpush1.msra.mxu0 %v407
    %663 = vmatprep.subr.mxu0 %v412
    %664 = vmatpush1.msra.mxu0 %v411
    %665 = vmatprep.subr.mxu0 %v416
    %666 = vmatpush1.msra.mxu0 %v415
    %667 = vmatprep.subr.mxu0 %v420
    %668 = vmatpush1.msra.mxu0 %v419
    %669 = vmatprep.subr.mxu0 %v424
    %670 = vmatpush1.msra.mxu0 %v423
    %671 = vmatprep.subr.mxu0 %v428
    %672 = vmatpush1.msra.mxu0 %v427
    %673 = vmatprep.subr.mxu0 %v432
    %674 = vmatpush1.msra.mxu0 %v431
    %675 = vmatprep.subr.mxu0 %v436
    %676 = vmatpush1.msra.mxu0 %v435
    %677 = vmatprep.subr.mxu0 %v440
    %678 = vmatpush1.msra.mxu0 %v439
    %679 = vmatprep.subr.mxu0 %v444
    %680 = vmatpush1.msra.mxu0 %v443
    %681 = vmatprep.subr.mxu0 %v448
    %682 = vmatpush1.msra.mxu0 %v447
    %683 = vmatprep.subr.mxu0 %v452
    %684 = vmatpush1.msra.mxu0 %v451
    %685 = vmatprep.subr.mxu0 %v456
    %686 = vmatpush1.msra.mxu0 %v455
    %687 = vmatprep.subr.mxu0 %v460
    %688 = vmatpush1.msra.mxu0 %v459
    %689 = vmatprep.subr.mxu0 %v464
    %690 = vmatpush1.msra.mxu0 %v463
    %691 = vmatprep.subr.mxu0 %v468
    %692 = vmatpush1.msra.mxu0 %v467
    %693 = vmatprep.subr.mxu0 %v472
    %694 = vmatpush1.msra.mxu0 %v471
    %695 = vmatprep.subr.mxu0 %v476
    %696 = vmatpush1.msra.mxu0 %v475
    %697 = vmatprep.mubr.f32.mxu0 %v93
    %698 = vmatmul.mubr.f32.gmra.mrb[0].mxu0 %v92
    %v699 = vpop.f32.mrb[0].mxu0
    %v700 = vadd.f32 %v629, %v699
    %v701 = vpop.f32.mrb[0].mxu0
    %v702 = vadd.f32 %v631, %v701
    %703 = vdwg.mxu0
    %704 = vmatprep.subr.mxu0 %v480
    %705 = vmatpush1.msra.mxu0 %v479
    %706 = vmatprep.subr.mxu0 %v484
    %707 = vmatpush1.msra.mxu0 %v483
    %708 = vmatprep.subr.mxu0 0.0
    %709 = vmatpush1.msra.mxu0 0.0
    %710 = vmatprep.subr.mxu0 0.0
    %711 = vmatpush1.msra.mxu0 0.0
    %712 = vmatprep.subr.mxu0 0.0
    %713 = vmatpush1.msra.mxu0 0.0
    %714 = vmatprep.subr.mxu0 0.0
    %715 = vmatpush1.msra.mxu0 0.0
    %716 = vmatprep.subr.mxu0 0.0
    %717 = vmatpush1.msra.mxu0 0.0
    %718 = vmatprep.subr.mxu0 0.0
    %719 = vmatpush1.msra.mxu0 0.0
    %720 = vmatprep.subr.mxu0 0.0
    %721 = vmatpush1.msra.mxu0 0.0
    %722 = vmatprep.subr.mxu0 0.0
    %723 = vmatpush1.msra.mxu0 0.0
    %724 = vmatprep.subr.mxu0 0.0
    %725 = vmatpush1.msra.mxu0 0.0
    %726 = vmatprep.subr.mxu0 0.0
    %727 = vmatpush1.msra.mxu0 0.0
    %728 = vmatprep.subr.mxu0 0.0
    %729 = vmatpush1.msra.mxu0 0.0
    %730 = vmatprep.subr.mxu0 0.0
    %731 = vmatpush1.msra.mxu0 0.0
    %732 = vmatprep.subr.mxu0 0.0
    %733 = vmatpush1.msra.mxu0 0.0
    %734 = vmatprep.subr.mxu0 0.0
    %735 = vmatpush1.msra.mxu0 0.0
    %736 = vmatprep.subr.mxu0 0.0
    %737 = vmatpush1.msra.mxu0 0.0
    %738 = vmatprep.subr.mxu0 0.0
    %739 = vmatpush1.msra.mxu0 0.0
    %740 = vmatprep.subr.mxu0 0.0
    %741 = vmatpush1.msra.mxu0 0.0
    %742 = vmatprep.subr.mxu0 0.0
    %743 = vmatpush1.msra.mxu0 0.0
    %744 = vmatprep.subr.mxu0 0.0
    %745 = vmatpush1.msra.mxu0 0.0
    %746 = vmatprep.subr.mxu0 0.0
    %747 = vmatpush1.msra.mxu0 0.0
    %748 = vmatprep.subr.mxu0 0.0
    %749 = vmatpush1.msra.mxu0 0.0
    %750 = vmatprep.subr.mxu0 0.0
    %751 = vmatpush1.msra.mxu0 0.0
    %752 = vmatprep.subr.mxu0 0.0
    %753 = vmatpush1.msra.mxu0 0.0
    %754 = vmatprep.subr.mxu0 0.0
    %755 = vmatpush1.msra.mxu0 0.0
    %756 = vmatprep.subr.mxu0 0.0
    %757 = vmatpush1.msra.mxu0 0.0
    %758 = vmatprep.subr.mxu0 0.0
    %759 = vmatpush1.msra.mxu0 0.0
    %760 = vmatprep.subr.mxu0 0.0
    %761 = vmatpush1.msra.mxu0 0.0
    %762 = vmatprep.subr.mxu0 0.0
    %763 = vmatpush1.msra.mxu0 0.0
    %764 = vmatprep.subr.mxu0 0.0
    %765 = vmatpush1.msra.mxu0 0.0
    %766 = vmatprep.subr.mxu0 0.0
    %767 = vmatpush1.msra.mxu0 0.0
    %768 = vmatprep.mubr.f32.mxu0 0.0
    %769 = vmatmul.mubr.f32.gmra.mrb[0].mxu0 %v489
    %v770 = vpop.f32.mrb[0].mxu0
    %v771 = vadd.f32 %v700, %v770
    %v772 = vpop.f32.mrb[0].mxu0
    %v773 = vadd.f32 %v702, %v772
    %774 = vdwg.mxu0
    %775 = vmatprep.subr.mxu0 %v98
    %776 = vmatpush1.msra.mxu0 %v97
    %777 = vmatprep.subr.mxu0 %v102
    %778 = vmatpush1.msra.mxu0 %v101
    %779 = vmatprep.subr.mxu0 %v106
    %780 = vmatpush1.msra.mxu0 %v105
    %781 = vmatprep.subr.mxu0 %v110
    %782 = vmatpush1.msra.mxu0 %v109
    %783 = vmatprep.subr.mxu0 %v114
    %784 = vmatpush1.msra.mxu0 %v113
    %785 = vmatprep.subr.mxu0 %v118
    %786 = vmatpush1.msra.mxu0 %v117
    %787 = vmatprep.subr.mxu0 %v122
    %788 = vmatpush1.msra.mxu0 %v121
    %789 = vmatprep.subr.mxu0 %v126
    %790 = vmatpush1.msra.mxu0 %v125
    %791 = vmatprep.subr.mxu0 %v130
    %792 = vmatpush1.msra.mxu0 %v129
    %793 = vmatprep.subr.mxu0 %v134
    %794 = vmatpush1.msra.mxu0 %v133
    %795 = vmatprep.subr.mxu0 %v138
    %796 = vmatpush1.msra.mxu0 %v137
    %797 = vmatprep.subr.mxu0 %v142
    %798 = vmatpush1.msra.mxu0 %v141
    %799 = vmatprep.subr.mxu0 %v146
    %800 = vmatpush1.msra.mxu0 %v145
    %801 = vmatprep.subr.mxu0 %v150
    %802 = vmatpush1.msra.mxu0 %v149
    %803 = vmatprep.subr.mxu0 %v154
    %804 = vmatpush1.msra.mxu0 %v153
    %805 = vmatprep.subr.mxu0 %v158
    %806 = vmatpush1.msra.mxu0 %v157
    %807 = vmatprep.subr.mxu0 %v162
    %808 = vmatpush1.msra.mxu0 %v161
    %809 = vmatprep.subr.mxu0 %v166
    %810 = vmatpush1.msra.mxu0 %v165
    %811 = vmatprep.subr.mxu0 %v170
    %812 = vmatpush1.msra.mxu0 %v169
    %813 = vmatprep.subr.mxu0 %v174
    %814 = vmatpush1.msra.mxu0 %v173
    %815 = vmatprep.subr.mxu0 %v178
    %816 = vmatpush1.msra.mxu0 %v177
    %817 = vmatprep.subr.mxu0 %v182
    %818 = vmatpush1.msra.mxu0 %v181
    %819 = vmatprep.subr.mxu0 %v186
    %820 = vmatpush1.msra.mxu0 %v185
    %821 = vmatprep.subr.mxu0 %v190
    %822 = vmatpush1.msra.mxu0 %v189
    %823 = vmatprep.subr.mxu0 %v194
    %824 = vmatpush1.msra.mxu0 %v193
    %825 = vmatprep.subr.mxu0 %v198
    %826 = vmatpush1.msra.mxu0 %v197
    %827 = vmatprep.subr.mxu0 %v202
    %828 = vmatpush1.msra.mxu0 %v201
    %829 = vmatprep.subr.mxu0 %v206
    %830 = vmatpush1.msra.mxu0 %v205
    %831 = vmatprep.subr.mxu0 %v210
    %832 = vmatpush1.msra.mxu0 %v209
    %833 = vmatprep.subr.mxu0 %v214
    %834 = vmatpush1.msra.mxu0 %v213
    %835 = vmatprep.subr.mxu0 %v218
    %836 = vmatpush1.msra.mxu0 %v217
    %837 = vmatprep.subr.mxu0 %v222
    %838 = vmatpush1.msra.mxu0 %v221
    %839 = vmatprep.mubr.f32.mxu0 %v89
    %840 = vmatmul.mubr.f32.gmra.mrb[0].mxu0 %v88
    %v841 = vpop.f32.mrb[0].mxu0
    %v842 = vadd.f32 0.0, %v841
    %v843 = vpop.f32.mrb[0].mxu0
    %v844 = vadd.f32 0.0, %v843
    %845 = vdwg.mxu0
    %846 = vmatprep.subr.mxu0 %v226
    %847 = vmatpush1.msra.mxu0 %v225
    %848 = vmatprep.subr.mxu0 %v230
    %849 = vmatpush1.msra.mxu0 %v229
    %850 = vmatprep.subr.mxu0 %v234
    %851 = vmatpush1.msra.mxu0 %v233
    %852 = vmatprep.subr.mxu0 %v238
    %853 = vmatpush1.msra.mxu0 %v237
    %854 = vmatprep.subr.mxu0 %v242
    %855 = vmatpush1.msra.mxu0 %v241
    %856 = vmatprep.subr.mxu0 %v246
    %857 = vmatpush1.msra.mxu0 %v245
    %858 = vmatprep.subr.mxu0 %v250
    %859 = vmatpush1.msra.mxu0 %v249
    %860 = vmatprep.subr.mxu0 %v254
    %861 = vmatpush1.msra.mxu0 %v253
    %862 = vmatprep.subr.mxu0 %v258
    %863 = vmatpush1.msra.mxu0 %v257
    %864 = vmatprep.subr.mxu0 %v262
    %865 = vmatpush1.msra.mxu0 %v261
    %866 = vmatprep.subr.mxu0 %v266
    %867 = vmatpush1.msra.mxu0 %v265
    %868 = vmatprep.subr.mxu0 %v270
    %869 = vmatpush1.msra.mxu0 %v269
    %870 = vmatprep.subr.mxu0 %v274
    %871 = vmatpush1.msra.mxu0 %v273
    %872 = vmatprep.subr.mxu0 %v278
    %873 = vmatpush1.msra.mxu0 %v277
    %874 = vmatprep.subr.mxu0 %v282
    %875 = vmatpush1.msra.mxu0 %v281
    %876 = vmatprep.subr.mxu0 %v286
    %877 = vmatpush1.msra.mxu0 %v285
    %878 = vmatprep.subr.mxu0 %v290
    %879 = vmatpush1.msra.mxu0 %v289
    %880 = vmatprep.subr.mxu0 %v294
    %881 = vmatpush1.msra.mxu0 %v293
    %882 = vmatprep.subr.mxu0 %v298
    %883 = vmatpush1.msra.mxu0 %v297
    %884 = vmatprep.subr.mxu0 %v302
    %885 = vmatpush1.msra.mxu0 %v301
    %886 = vmatprep.subr.mxu0 %v306
    %887 = vmatpush1.msra.mxu0 %v305
    %888 = vmatprep.subr.mxu0 %v310
    %889 = vmatpush1.msra.mxu0 %v309
    %890 = vmatprep.subr.mxu0 %v314
    %891 = vmatpush1.msra.mxu0 %v313
    %892 = vmatprep.subr.mxu0 %v318
    %893 = vmatpush1.msra.mxu0 %v317
    %894 = vmatprep.subr.mxu0 %v322
    %895 = vmatpush1.msra.mxu0 %v321
    %896 = vmatprep.subr.mxu0 %v326
    %897 = vmatpush1.msra.mxu0 %v325
    %898 = vmatprep.subr.mxu0 %v330
    %899 = vmatpush1.msra.mxu0 %v329
    %900 = vmatprep.subr.mxu0 %v334
    %901 = vmatpush1.msra.mxu0 %v333
    %902 = vmatprep.subr.mxu0 %v338
    %903 = vmatpush1.msra.mxu0 %v337
    %904 = vmatprep.subr.mxu0 %v342
    %905 = vmatpush1.msra.mxu0 %v341
    %906 = vmatprep.subr.mxu0 %v346
    %907 = vmatpush1.msra.mxu0 %v345
    %908 = vmatprep.subr.mxu0 %v350
    %909 = vmatpush1.msra.mxu0 %v349
    %910 = vmatprep.mubr.f32.mxu0 %v91
    %911 = vmatmul.mubr.f32.gmra.mrb[0].mxu0 %v90
    %v912 = vpop.f32.mrb[0].mxu0
    %v913 = vadd.f32 %v842, %v912
    %v914 = vpop.f32.mrb[0].mxu0
    %v915 = vadd.f32 %v844, %v914
    %916 = vdwg.mxu0
    %917 = vmatprep.subr.mxu0 %v354
    %918 = vmatpush1.msra.mxu0 %v353
    %919 = vmatprep.subr.mxu0 %v358
    %920 = vmatpush1.msra.mxu0 %v357
    %921 = vmatprep.subr.mxu0 %v362
    %922 = vmatpush1.msra.mxu0 %v361
    %923 = vmatprep.subr.mxu0 %v366
    %924 = vmatpush1.msra.mxu0 %v365
    %925 = vmatprep.subr.mxu0 %v370
    %926 = vmatpush1.msra.mxu0 %v369
    %927 = vmatprep.subr.mxu0 %v374
    %928 = vmatpush1.msra.mxu0 %v373
    %929 = vmatprep.subr.mxu0 %v378
    %930 = vmatpush1.msra.mxu0 %v377
    %931 = vmatprep.subr.mxu0 %v382
    %932 = vmatpush1.msra.mxu0 %v381
    %933 = vmatprep.subr.mxu0 %v386
    %934 = vmatpush1.msra.mxu0 %v385
    %935 = vmatprep.subr.mxu0 %v390
    %936 = vmatpush1.msra.mxu0 %v389
    %937 = vmatprep.subr.mxu0 %v394
    %938 = vmatpush1.msra.mxu0 %v393
    %939 = vmatprep.subr.mxu0 %v398
    %940 = vmatpush1.msra.mxu0 %v397
    %941 = vmatprep.subr.mxu0 %v402
    %942 = vmatpush1.msra.mxu0 %v401
    %943 = vmatprep.subr.mxu0 %v406
    %944 = vmatpush1.msra.mxu0 %v405
    %945 = vmatprep.subr.mxu0 %v410
    %946 = vmatpush1.msra.mxu0 %v409
    %947 = vmatprep.subr.mxu0 %v414
    %948 = vmatpush1.msra.mxu0 %v413
    %949 = vmatprep.subr.mxu0 %v418
    %950 = vmatpush1.msra.mxu0 %v417
    %951 = vmatprep.subr.mxu0 %v422
    %952 = vmatpush1.msra.mxu0 %v421
    %953 = vmatprep.subr.mxu0 %v426
    %954 = vmatpush1.msra.mxu0 %v425
    %955 = vmatprep.subr.mxu0 %v430
    %956 = vmatpush1.msra.mxu0 %v429
    %957 = vmatprep.subr.mxu0 %v434
    %958 = vmatpush1.msra.mxu0 %v433
    %959 = vmatprep.subr.mxu0 %v438
    %960 = vmatpush1.msra.mxu0 %v437
    %961 = vmatprep.subr.mxu0 %v442
    %962 = vmatpush1.msra.mxu0 %v441
    %963 = vmatprep.subr.mxu0 %v446
    %964 = vmatpush1.msra.mxu0 %v445
    %965 = vmatprep.subr.mxu0 %v450
    %966 = vmatpush1.msra.mxu0 %v449
    %967 = vmatprep.subr.mxu0 %v454
    %968 = vmatpush1.msra.mxu0 %v453
    %969 = vmatprep.subr.mxu0 %v458
    %970 = vmatpush1.msra.mxu0 %v457
    %971 = vmatprep.subr.mxu0 %v462
    %972 = vmatpush1.msra.mxu0 %v461
    %973 = vmatprep.subr.mxu0 %v466
    %974 = vmatpush1.msra.mxu0 %v465
    %975 = vmatprep.subr.mxu0 %v470
    %976 = vmatpush1.msra.mxu0 %v469
    %977 = vmatprep.subr.mxu0 %v474
    %978 = vmatpush1.msra.mxu0 %v473
    %979 = vmatprep.subr.mxu0 %v478
    %980 = vmatpush1.msra.mxu0 %v477
    %981 = vmatprep.mubr.f32.mxu0 %v93
    %982 = vmatmul.mubr.f32.gmra.mrb[0].mxu0 %v92
    %v983 = vpop.f32.mrb[0].mxu0
    %v984 = vadd.f32 %v913, %v983
    %v985 = vpop.f32.mrb[0].mxu0
    %v986 = vadd.f32 %v915, %v985
    %987 = vdwg.mxu0
    %988 = vmatprep.subr.mxu0 %v482
    %989 = vmatpush1.msra.mxu0 %v481
    %990 = vmatprep.subr.mxu0 %v486
    %991 = vmatpush1.msra.mxu0 %v485
    %992 = vmatprep.subr.mxu0 0.0
    %993 = vmatpush1.msra.mxu0 0.0
    %994 = vmatprep.subr.mxu0 0.0
    %995 = vmatpush1.msra.mxu0 0.0
    %996 = vmatprep.subr.mxu0 0.0
    %997 = vmatpush1.msra.mxu0 0.0
    %998 = vmatprep.subr.mxu0 0.0
    %999 = vmatpush1.msra.mxu0 0.0
    %1000 = vmatprep.subr.mxu0 0.0
    %1001 = vmatpush1.msra.mxu0 0.0
    %1002 = vmatprep.subr.mxu0 0.0
    %1003 = vmatpush1.msra.mxu0 0.0
    %1004 = vmatprep.subr.mxu0 0.0
    %1005 = vmatpush1.msra.mxu0 0.0
    %1006 = vmatprep.subr.mxu0 0.0
    %1007 = vmatpush1.msra.mxu0 0.0
    %1008 = vmatprep.subr.mxu0 0.0
    %1009 = vmatpush1.msra.mxu0 0.0
    %1010 = vmatprep.subr.mxu0 0.0
    %1011 = vmatpush1.msra.mxu0 0.0
    %1012 = vmatprep.subr.mxu0 0.0
    %1013 = vmatpush1.msra.mxu0 0.0
    %1014 = vmatprep.subr.mxu0 0.0
    %1015 = vmatpush1.msra.mxu0 0.0
    %1016 = vmatprep.subr.mxu0 0.0
    %1017 = vmatpush1.msra.mxu0 0.0
    %1018 = vmatprep.subr.mxu0 0.0
    %1019 = vmatpush1.msra.mxu0 0.0
    %1020 = vmatprep.subr.mxu0 0.0
    %1021 = vmatpush1.msra.mxu0 0.0
    %1022 = vmatprep.subr.mxu0 0.0
    %1023 = vmatpush1.msra.mxu0 0.0
    %1024 = vmatprep.subr.mxu0 0.0
    %1025 = vmatpush1.msra.mxu0 0.0
    %1026 = vmatprep.subr.mxu0 0.0
    %1027 = vmatpush1.msra.mxu0 0.0
    %1028 = vmatprep.subr.mxu0 0.0
    %1029 = vmatpush1.msra.mxu0 0.0
    %1030 = vmatprep.subr.mxu0 0.0
    %1031 = vmatpush1.msra.mxu0 0.0
    %1032 = vmatprep.subr.mxu0 0.0
    %1033 = vmatpush1.msra.mxu0 0.0
    %1034 = vmatprep.subr.mxu0 0.0
    %1035 = vmatpush1.msra.mxu0 0.0
    %1036 = vmatprep.subr.mxu0 0.0
    %1037 = vmatpush1.msra.mxu0 0.0
    %1038 = vmatprep.subr.mxu0 0.0
    %1039 = vmatpush1.msra.mxu0 0.0
    %1040 = vmatprep.subr.mxu0 0.0
    %1041 = vmatpush1.msra.mxu0 0.0
    %1042 = vmatprep.subr.mxu0 0.0
    %1043 = vmatpush1.msra.mxu0 0.0
    %1044 = vmatprep.subr.mxu0 0.0
    %1045 = vmatpush1.msra.mxu0 0.0
    %1046 = vmatprep.subr.mxu0 0.0
    %1047 = vmatpush1.msra.mxu0 0.0
    %1048 = vmatprep.subr.mxu0 0.0
    %1049 = vmatpush1.msra.mxu0 0.0
    %1050 = vmatprep.subr.mxu0 0.0
    %1051 = vmatpush1.msra.mxu0 0.0
    %1052 = vmatprep.mubr.f32.mxu0 0.0
    %1053 = vmatmul.mubr.f32.gmra.mrb[0].mxu0 %v489
    %v1054 = vpop.f32.mrb[0].mxu0
    %v1055 = vadd.f32 %v984, %v1054
    %v1056 = vpop.f32.mrb[0].mxu0
    %v1057 = vadd.f32 %v986, %v1056
    %1058 = vdwg.mxu0
    %v1059 = vmax.f32 %v771, 0.0
    %v1060 = vmax.f32 %v773, 0.0
    %v1061 = vmax.f32 %v1055, 0.0
    %v1062 = vmax.f32 %v1057, 0.0
    %v1063 = vld [vmem:[#allocation5] sm:$0xff]
    %v1064 = vld [vmem:[#allocation5 + $0x8] sm:$0xff]
    %v1065 = vld [vmem:[#allocation5 + $0x10] sm:$0xff]
    %v1066 = vld [vmem:[#allocation5 + $0x18] sm:$0xff]
    %v1067 = vld [vmem:[#allocation5 + $0x20] sm:$0xff]
    %v1068 = vld [vmem:[#allocation5 + $0x28] sm:$0xff]
    %v1069 = vld [vmem:[#allocation5 + $0x30] sm:$0xff]
    %v1070 = vld [vmem:[#allocation5 + $0x38] sm:$0xff]
    %v1071 = vld [vmem:[#allocation5 + $0x40] sm:$0xff]
    %v1072 = vld [vmem:[#allocation5 + $0x48] sm:$0xff]
    %v1073 = vld [vmem:[#allocation5 + $0x50] sm:$0xff]
    %v1074 = vld [vmem:[#allocation5 + $0x58] sm:$0xff]
    %v1075 = vld [vmem:[#allocation5 + $0x60] sm:$0xff]
    %v1076 = vld [vmem:[#allocation5 + $0x68] sm:$0xff]
    %v1077 = vld [vmem:[#allocation5 + $0x70] sm:$0xff]
    %v1078 = vld [vmem:[#allocation5 + $0x78] sm:$0xff]
    %v1079 = vld [vmem:[#allocation5 + $0x80] sm:$0xff]
    %v1080 = vld [vmem:[#allocation5 + $0x88] sm:$0xff]
    %v1081 = vld [vmem:[#allocation5 + $0x90] sm:$0xff]
    %v1082 = vld [vmem:[#allocation5 + $0x98] sm:$0xff]
    %v1083 = vld [vmem:[#allocation5 + $0xa0] sm:$0xff]
    %v1084 = vld [vmem:[#allocation5 + $0xa8] sm:$0xff]
    %v1085 = vld [vmem:[#allocation5 + $0xb0] sm:$0xff]
    %v1086 = vld [vmem:[#allocation5 + $0xb8] sm:$0xff]
    %v1087 = vld [vmem:[#allocation5 + $0xc0] sm:$0xff]
    %v1088 = vld [vmem:[#allocation5 + $0xc8] sm:$0xff]
    %v1089 = vld [vmem:[#allocation5 + $0xd0] sm:$0xff]
    %v1090 = vld [vmem:[#allocation5 + $0xd8] sm:$0xff]
    %v1091 = vld [vmem:[#allocation5 + $0xe0] sm:$0xff]
    %v1092 = vld [vmem:[#allocation5 + $0xe8] sm:$0xff]
    %v1093 = vld [vmem:[#allocation5 + $0xf0] sm:$0xff]
    %v1094 = vld [vmem:[#allocation5 + $0xf8] sm:$0xff]
    %v1095 = vld [vmem:[#allocation5 + $0x100] sm:$0xff]
    %v1096 = vld [vmem:[#allocation5 + $0x108] sm:$0xff]
    %v1097 = vld [vmem:[#allocation5 + $0x110] sm:$0xff]
    %v1098 = vld [vmem:[#allocation5 + $0x118] sm:$0xff]
    %v1099 = vld [vmem:[#allocation5 + $0x120] sm:$0xff]
    %v1100 = vld [vmem:[#allocation5 + $0x128] sm:$0xff]
    %v1101 = vld [vmem:[#allocation5 + $0x130] sm:$0xff]
    %v1102 = vld [vmem:[#allocation5 + $0x138] sm:$0xff]
    %v1103 = vld [vmem:[#allocation5 + $0x140] sm:$0xff]
    %v1104 = vld [vmem:[#allocation5 + $0x148] sm:$0xff]
    %v1105 = vld [vmem:[#allocation5 + $0x150] sm:$0xff]
    %v1106 = vld [vmem:[#allocation5 + $0x158] sm:$0xff]
    %v1107 = vld [vmem:[#allocation5 + $0x160] sm:$0xff]
    %v1108 = vld [vmem:[#allocation5 + $0x168] sm:$0xff]
    %v1109 = vld [vmem:[#allocation5 + $0x170] sm:$0xff]
    %v1110 = vld [vmem:[#allocation5 + $0x178] sm:$0xff]
    %v1111 = vld [vmem:[#allocation5 + $0x180] sm:$0xff]
    %v1112 = vld [vmem:[#allocation5 + $0x188] sm:$0xff]
    %v1113 = vld [vmem:[#allocation5 + $0x190] sm:$0xff]
    %v1114 = vld [vmem:[#allocation5 + $0x198] sm:$0xff]
    %v1115 = vld [vmem:[#allocation5 + $0x1a0] sm:$0xff]
    %v1116 = vld [vmem:[#allocation5 + $0x1a8] sm:$0xff]
    %v1117 = vld [vmem:[#allocation5 + $0x1b0] sm:$0xff]
    %v1118 = vld [vmem:[#allocation5 + $0x1b8] sm:$0xff]
    %v1119 = vld [vmem:[#allocation5 + $0x1c0] sm:$0xff]
    %v1120 = vld [vmem:[#allocation5 + $0x1c8] sm:$0xff]
    %v1121 = vld [vmem:[#allocation5 + $0x1d0] sm:$0xff]
    %v1122 = vld [vmem:[#allocation5 + $0x1d8] sm:$0xff]
    %v1123 = vld [vmem:[#allocation5 + $0x1e0] sm:$0xff]
    %v1124 = vld [vmem:[#allocation5 + $0x1e8] sm:$0xff]
    %v1125 = vld [vmem:[#allocation5 + $0x1f0] sm:$0xff]
    %v1126 = vld [vmem:[#allocation5 + $0x1f8] sm:$0xff]
    %v1127 = vld [vmem:[#allocation5 + $0x200] sm:$0xff]
    %v1128 = vld [vmem:[#allocation5 + $0x208] sm:$0xff]
    %v1129 = vld [vmem:[#allocation5 + $0x210] sm:$0xff]
    %v1130 = vld [vmem:[#allocation5 + $0x218] sm:$0xff]
    %v1131 = vld [vmem:[#allocation5 + $0x220] sm:$0xff]
    %v1132 = vld [vmem:[#allocation5 + $0x228] sm:$0xff]
    %v1133 = vld [vmem:[#allocation5 + $0x230] sm:$0xff]
    %v1134 = vld [vmem:[#allocation5 + $0x238] sm:$0xff]
    %v1135 = vld [vmem:[#allocation5 + $0x240] sm:$0xff]
    %v1136 = vld [vmem:[#allocation5 + $0x248] sm:$0xff]
    %v1137 = vld [vmem:[#allocation5 + $0x250] sm:$0xff]
    %v1138 = vld [vmem:[#allocation5 + $0x258] sm:$0xff]
    %v1139 = vld [vmem:[#allocation5 + $0x260] sm:$0xff]
    %v1140 = vld [vmem:[#allocation5 + $0x268] sm:$0xff]
    %v1141 = vld [vmem:[#allocation5 + $0x270] sm:$0xff]
    %v1142 = vld [vmem:[#allocation5 + $0x278] sm:$0xff]
    %v1143 = vld [vmem:[#allocation5 + $0x280] sm:$0xff]
    %v1144 = vld [vmem:[#allocation5 + $0x288] sm:$0xff]
    %v1145 = vld [vmem:[#allocation5 + $0x290] sm:$0xff]
    %v1146 = vld [vmem:[#allocation5 + $0x298] sm:$0xff]
    %v1147 = vld [vmem:[#allocation5 + $0x2a0] sm:$0xff]
    %v1148 = vld [vmem:[#allocation5 + $0x2a8] sm:$0xff]
    %v1149 = vld [vmem:[#allocation5 + $0x2b0] sm:$0xff]
    %v1150 = vld [vmem:[#allocation5 + $0x2b8] sm:$0xff]
    %v1151 = vld [vmem:[#allocation5 + $0x2c0] sm:$0xff]
    %v1152 = vld [vmem:[#allocation5 + $0x2c8] sm:$0xff]
    %v1153 = vld [vmem:[#allocation5 + $0x2d0] sm:$0xff]
    %v1154 = vld [vmem:[#allocation5 + $0x2d8] sm:$0xff]
    %v1155 = vld [vmem:[#allocation5 + $0x2e0] sm:$0xff]
    %v1156 = vld [vmem:[#allocation5 + $0x2e8] sm:$0xff]
    %v1157 = vld [vmem:[#allocation5 + $0x2f0] sm:$0xff]
    %v1158 = vld [vmem:[#allocation5 + $0x2f8] sm:$0xff]
    %v1159 = vld [vmem:[#allocation5 + $0x300] sm:$0xff]
    %v1160 = vld [vmem:[#allocation5 + $0x308] sm:$0xff]
    %v1161 = vld [vmem:[#allocation5 + $0x310] sm:$0xff]
    %v1162 = vld [vmem:[#allocation5 + $0x318] sm:$0xff]
    %v1163 = vld [vmem:[#allocation5 + $0x320] sm:$0xff]
    %v1164 = vld [vmem:[#allocation5 + $0x328] sm:$0xff]
    %v1165 = vld [vmem:[#allocation5 + $0x330] sm:$0xff]
    %v1166 = vld [vmem:[#allocation5 + $0x338] sm:$0xff]
    %v1167 = vld [vmem:[#allocation5 + $0x340] sm:$0xff]
    %v1168 = vld [vmem:[#allocation5 + $0x348] sm:$0xff]
    %v1169 = vld [vmem:[#allocation5 + $0x350] sm:$0xff]
    %v1170 = vld [vmem:[#allocation5 + $0x358] sm:$0xff]
    %v1171 = vld [vmem:[#allocation5 + $0x360] sm:$0xff]
    %v1172 = vld [vmem:[#allocation5 + $0x368] sm:$0xff]
    %v1173 = vld [vmem:[#allocation5 + $0x370] sm:$0xff]
    %v1174 = vld [vmem:[#allocation5 + $0x378] sm:$0xff]
    %v1175 = vld [vmem:[#allocation5 + $0x380] sm:$0xff]
    %v1176 = vld [vmem:[#allocation5 + $0x388] sm:$0xff]
    %v1177 = vld [vmem:[#allocation5 + $0x390] sm:$0xff]
    %v1178 = vld [vmem:[#allocation5 + $0x398] sm:$0xff]
    %v1179 = vld [vmem:[#allocation5 + $0x3a0] sm:$0xff]
    %v1180 = vld [vmem:[#allocation5 + $0x3a8] sm:$0xff]
    %v1181 = vld [vmem:[#allocation5 + $0x3b0] sm:$0xff]
    %v1182 = vld [vmem:[#allocation5 + $0x3b8] sm:$0xff]
    %v1183 = vld [vmem:[#allocation5 + $0x3c0] sm:$0xff]
    %v1184 = vld [vmem:[#allocation5 + $0x3c8] sm:$0xff]
    %v1185 = vld [vmem:[#allocation5 + $0x3d0] sm:$0xff]
    %v1186 = vld [vmem:[#allocation5 + $0x3d8] sm:$0xff]
    %v1187 = vld [vmem:[#allocation5 + $0x3e0] sm:$0xff]
    %v1188 = vld [vmem:[#allocation5 + $0x3e8] sm:$0xff]
    %v1189 = vld [vmem:[#allocation5 + $0x3f0] sm:$0xff]
    %v1190 = vld [vmem:[#allocation5 + $0x3f8] sm:$0xff]
    %v1191 = vld [vmem:[#allocation7] sm:$0x3]
    %v1193 = vlaneseq
    %v1194 = vshrl.u32 %v1193, 7
    %v1195 = vsub.s32 0, %v1194
    %v1196 = vrot.slane %v1191, %v1195
    %v1197 = vlaneseq
    %v1198 = vshrl.u32 %v1197, 7
    %v1199 = vsub.s32 1, %v1198
    %v1200 = vrot.slane %v1191, %v1199
    %1203 = vmatprep.subr.mxu0 %v1064
    %1204 = vmatpush1.msra.mxu0 %v1063
    %1205 = vmatprep.subr.mxu0 %v1066
    %1206 = vmatpush1.msra.mxu0 %v1065
    %1207 = vmatprep.subr.mxu0 %v1068
    %1208 = vmatpush1.msra.mxu0 %v1067
    %1209 = vmatprep.subr.mxu0 %v1070
    %1210 = vmatpush1.msra.mxu0 %v1069
    %1211 = vmatprep.subr.mxu0 %v1072
    %1212 = vmatpush1.msra.mxu0 %v1071
    %1213 = vmatprep.subr.mxu0 %v1074
    %1214 = vmatpush1.msra.mxu0 %v1073
    %1215 = vmatprep.subr.mxu0 %v1076
    %1216 = vmatpush1.msra.mxu0 %v1075
    %1217 = vmatprep.subr.mxu0 %v1078
    %1218 = vmatpush1.msra.mxu0 %v1077
    %1219 = vmatprep.subr.mxu0 %v1080
    %1220 = vmatpush1.msra.mxu0 %v1079
    %1221 = vmatprep.subr.mxu0 %v1082
    %1222 = vmatpush1.msra.mxu0 %v1081
    %1223 = vmatprep.subr.mxu0 %v1084
    %1224 = vmatpush1.msra.mxu0 %v1083
    %1225 = vmatprep.subr.mxu0 %v1086
    %1226 = vmatpush1.msra.mxu0 %v1085
    %1227 = vmatprep.subr.mxu0 %v1088
    %1228 = vmatpush1.msra.mxu0 %v1087
    %1229 = vmatprep.subr.mxu0 %v1090
    %1230 = vmatpush1.msra.mxu0 %v1089
    %1231 = vmatprep.subr.mxu0 %v1092
    %1232 = vmatpush1.msra.mxu0 %v1091
    %1233 = vmatprep.subr.mxu0 %v1094
    %1234 = vmatpush1.msra.mxu0 %v1093
    %1235 = vmatprep.subr.mxu0 %v1096
    %1236 = vmatpush1.msra.mxu0 %v1095
    %1237 = vmatprep.subr.mxu0 %v1098
    %1238 = vmatpush1.msra.mxu0 %v1097
    %1239 = vmatprep.subr.mxu0 %v1100
    %1240 = vmatpush1.msra.mxu0 %v1099
    %1241 = vmatprep.subr.mxu0 %v1102
    %1242 = vmatpush1.msra.mxu0 %v1101
    %1243 = vmatprep.subr.mxu0 %v1104
    %1244 = vmatpush1.msra.mxu0 %v1103
    %1245 = vmatprep.subr.mxu0 %v1106
    %1246 = vmatpush1.msra.mxu0 %v1105
    %1247 = vmatprep.subr.mxu0 %v1108
    %1248 = vmatpush1.msra.mxu0 %v1107
    %1249 = vmatprep.subr.mxu0 %v1110
    %1250 = vmatpush1.msra.mxu0 %v1109
    %1251 = vmatprep.subr.mxu0 %v1112
    %1252 = vmatpush1.msra.mxu0 %v1111
    %1253 = vmatprep.subr.mxu0 %v1114
    %1254 = vmatpush1.msra.mxu0 %v1113
    %1255 = vmatprep.subr.mxu0 %v1116
    %1256 = vmatpush1.msra.mxu0 %v1115
    %1257 = vmatprep.subr.mxu0 %v1118
    %1258 = vmatpush1.msra.mxu0 %v1117
    %1259 = vmatprep.subr.mxu0 %v1120
    %1260 = vmatpush1.msra.mxu0 %v1119
    %1261 = vmatprep.subr.mxu0 %v1122
    %1262 = vmatpush1.msra.mxu0 %v1121
    %1263 = vmatprep.subr.mxu0 %v1124
    %1264 = vmatpush1.msra.mxu0 %v1123
    %1265 = vmatprep.subr.mxu0 %v1126
    %1266 = vmatpush1.msra.mxu0 %v1125
    %1267 = vmatprep.mubr.f32.mxu0 %v1060
    %1268 = vmatmul.mubr.f32.gmra.mrb[0].mxu0 %v1059
    %v1269 = vpop.f32.mrb[0].mxu0
    %v1270 = vadd.f32 %v1196, %v1269
    %v1271 = vpop.f32.mrb[0].mxu0
    %v1272 = vadd.f32 %v1200, %v1271
    %1273 = vdwg.mxu0
    %1274 = vmatprep.subr.mxu0 %v1128
    %1275 = vmatpush1.msra.mxu0 %v1127
    %1276 = vmatprep.subr.mxu0 %v1130
    %1277 = vmatpush1.msra.mxu0 %v1129
    %1278 = vmatprep.subr.mxu0 %v1132
    %1279 = vmatpush1.msra.mxu0 %v1131
    %1280 = vmatprep.subr.mxu0 %v1134
    %1281 = vmatpush1.msra.mxu0 %v1133
    %1282 = vmatprep.subr.mxu0 %v1136
    %1283 = vmatpush1.msra.mxu0 %v1135
    %1284 = vmatprep.subr.mxu0 %v1138
    %1285 = vmatpush1.msra.mxu0 %v1137
    %1286 = vmatprep.subr.mxu0 %v1140
    %1287 = vmatpush1.msra.mxu0 %v1139
    %1288 = vmatprep.subr.mxu0 %v1142
    %1289 = vmatpush1.msra.mxu0 %v1141
    %1290 = vmatprep.subr.mxu0 %v1144
    %1291 = vmatpush1.msra.mxu0 %v1143
    %1292 = vmatprep.subr.mxu0 %v1146
    %1293 = vmatpush1.msra.mxu0 %v1145
    %1294 = vmatprep.subr.mxu0 %v1148
    %1295 = vmatpush1.msra.mxu0 %v1147
    %1296 = vmatprep.subr.mxu0 %v1150
    %1297 = vmatpush1.msra.mxu0 %v1149
    %1298 = vmatprep.subr.mxu0 %v1152
    %1299 = vmatpush1.msra.mxu0 %v1151
    %1300 = vmatprep.subr.mxu0 %v1154
    %1301 = vmatpush1.msra.mxu0 %v1153
    %1302 = vmatprep.subr.mxu0 %v1156
    %1303 = vmatpush1.msra.mxu0 %v1155
    %1304 = vmatprep.subr.mxu0 %v1158
    %1305 = vmatpush1.msra.mxu0 %v1157
    %1306 = vmatprep.subr.mxu0 %v1160
    %1307 = vmatpush1.msra.mxu0 %v1159
    %1308 = vmatprep.subr.mxu0 %v1162
    %1309 = vmatpush1.msra.mxu0 %v1161
    %1310 = vmatprep.subr.mxu0 %v1164
    %1311 = vmatpush1.msra.mxu0 %v1163
    %1312 = vmatprep.subr.mxu0 %v1166
    %1313 = vmatpush1.msra.mxu0 %v1165
    %1314 = vmatprep.subr.mxu0 %v1168
    %1315 = vmatpush1.msra.mxu0 %v1167
    %1316 = vmatprep.subr.mxu0 %v1170
    %1317 = vmatpush1.msra.mxu0 %v1169
    %1318 = vmatprep.subr.mxu0 %v1172
    %1319 = vmatpush1.msra.mxu0 %v1171
    %1320 = vmatprep.subr.mxu0 %v1174
    %1321 = vmatpush1.msra.mxu0 %v1173
    %1322 = vmatprep.subr.mxu0 %v1176
    %1323 = vmatpush1.msra.mxu0 %v1175
    %1324 = vmatprep.subr.mxu0 %v1178
    %1325 = vmatpush1.msra.mxu0 %v1177
    %1326 = vmatprep.subr.mxu0 %v1180
    %1327 = vmatpush1.msra.mxu0 %v1179
    %1328 = vmatprep.subr.mxu0 %v1182
    %1329 = vmatpush1.msra.mxu0 %v1181
    %1330 = vmatprep.subr.mxu0 %v1184
    %1331 = vmatpush1.msra.mxu0 %v1183
    %1332 = vmatprep.subr.mxu0 %v1186
    %1333 = vmatpush1.msra.mxu0 %v1185
    %1334 = vmatprep.subr.mxu0 %v1188
    %1335 = vmatpush1.msra.mxu0 %v1187
    %1336 = vmatprep.subr.mxu0 %v1190
    %1337 = vmatpush1.msra.mxu0 %v1189
    %1338 = vmatprep.mubr.f32.mxu0 %v1062
    %1339 = vmatmul.mubr.f32.gmra.mrb[0].mxu0 %v1061
    %v1340 = vpop.f32.mrb[0].mxu0
    %v1341 = vadd.f32 %v1270, %v1340
    %v1342 = vpop.f32.mrb[0].mxu0
    %v1343 = vadd.f32 %v1272, %v1342
    %1344 = vdwg.mxu0
    %v1345 = vmax.f32 %v1341, 0.0
    %v1346 = vmax.f32 %v1343, 0.0
    %v1347 = vld [vmem:[#allocation8] sm:$0xff]
    %v1348 = vld [vmem:[#allocation8 + $0x8] sm:$0xff]
    %v1349 = vld [vmem:[#allocation8 + $0x10] sm:$0xff]
    %v1350 = vld [vmem:[#allocation8 + $0x18] sm:$0xff]
    %v1351 = vld [vmem:[#allocation8 + $0x20] sm:$0xff]
    %v1352 = vld [vmem:[#allocation8 + $0x28] sm:$0xff]
    %v1353 = vld [vmem:[#allocation8 + $0x30] sm:$0xff]
    %v1354 = vld [vmem:[#allocation8 + $0x38] sm:$0xff]
    %v1355 = vld [vmem:[#allocation8 + $0x40] sm:$0xff]
    %v1356 = vld [vmem:[#allocation8 + $0x48] sm:$0xff]
    %v1357 = vld [vmem:[#allocation8 + $0x50] sm:$0xff]
    %v1358 = vld [vmem:[#allocation8 + $0x58] sm:$0xff]
    %v1359 = vld [vmem:[#allocation8 + $0x60] sm:$0xff]
    %v1360 = vld [vmem:[#allocation8 + $0x68] sm:$0xff]
    %v1361 = vld [vmem:[#allocation8 + $0x70] sm:$0xff]
    %v1362 = vld [vmem:[#allocation8 + $0x78] sm:$0xff]
    %v1363 = vld [vmem:[#allocation8 + $0x80] sm:$0xff]
    %v1364 = vld [vmem:[#allocation8 + $0x88] sm:$0xff]
    %v1365 = vld [vmem:[#allocation8 + $0x90] sm:$0xff]
    %v1366 = vld [vmem:[#allocation8 + $0x98] sm:$0xff]
    %v1367 = vld [vmem:[#allocation8 + $0xa0] sm:$0xff]
    %v1368 = vld [vmem:[#allocation8 + $0xa8] sm:$0xff]
    %v1369 = vld [vmem:[#allocation8 + $0xb0] sm:$0xff]
    %v1370 = vld [vmem:[#allocation8 + $0xb8] sm:$0xff]
    %v1371 = vld [vmem:[#allocation8 + $0xc0] sm:$0xff]
    %v1372 = vld [vmem:[#allocation8 + $0xc8] sm:$0xff]
    %v1373 = vld [vmem:[#allocation8 + $0xd0] sm:$0xff]
    %v1374 = vld [vmem:[#allocation8 + $0xd8] sm:$0xff]
    %v1375 = vld [vmem:[#allocation8 + $0xe0] sm:$0xff]
    %v1376 = vld [vmem:[#allocation8 + $0xe8] sm:$0xff]
    %v1377 = vld [vmem:[#allocation8 + $0xf0] sm:$0xff]
    %v1378 = vld [vmem:[#allocation8 + $0xf8] sm:$0xff]
    %v1379 = vld [vmem:[#allocation10] sm:$0x1]
    %v1381 = vlaneseq
    %v1382 = vshrl.u32 %v1381, 7
    %v1383 = vsub.s32 0, %v1382
    %v1384 = vrot.slane %v1379, %v1383
    %1386 = vmatprep.subr.mxu0 0.0
    %1387 = vmatpush1.msra.mxu0 %v1347
    %1388 = vmatprep.subr.mxu0 0.0
    %1389 = vmatpush1.msra.mxu0 %v1348
    %1390 = vmatprep.subr.mxu0 0.0
    %1391 = vmatpush1.msra.mxu0 %v1349
    %1392 = vmatprep.subr.mxu0 0.0
    %1393 = vmatpush1.msra.mxu0 %v1350
    %1394 = vmatprep.subr.mxu0 0.0
    %1395 = vmatpush1.msra.mxu0 %v1351
    %1396 = vmatprep.subr.mxu0 0.0
    %1397 = vmatpush1.msra.mxu0 %v1352
    %1398 = vmatprep.subr.mxu0 0.0
    %1399 = vmatpush1.msra.mxu0 %v1353
    %1400 = vmatprep.subr.mxu0 0.0
    %1401 = vmatpush1.msra.mxu0 %v1354
    %1402 = vmatprep.subr.mxu0 0.0
    %1403 = vmatpush1.msra.mxu0 %v1355
    %1404 = vmatprep.subr.mxu0 0.0
    %1405 = vmatpush1.msra.mxu0 %v1356
    %1406 = vmatprep.subr.mxu0 0.0
    %1407 = vmatpush1.msra.mxu0 %v1357
    %1408 = vmatprep.subr.mxu0 0.0
    %1409 = vmatpush1.msra.mxu0 %v1358
    %1410 = vmatprep.subr.mxu0 0.0
    %1411 = vmatpush1.msra.mxu0 %v1359
    %1412 = vmatprep.subr.mxu0 0.0
    %1413 = vmatpush1.msra.mxu0 %v1360
    %1414 = vmatprep.subr.mxu0 0.0
    %1415 = vmatpush1.msra.mxu0 %v1361
    %1416 = vmatprep.subr.mxu0 0.0
    %1417 = vmatpush1.msra.mxu0 %v1362
    %1418 = vmatprep.subr.mxu0 0.0
    %1419 = vmatpush1.msra.mxu0 %v1363
    %1420 = vmatprep.subr.mxu0 0.0
    %1421 = vmatpush1.msra.mxu0 %v1364
    %1422 = vmatprep.subr.mxu0 0.0
    %1423 = vmatpush1.msra.mxu0 %v1365
    %1424 = vmatprep.subr.mxu0 0.0
    %1425 = vmatpush1.msra.mxu0 %v1366
    %1426 = vmatprep.subr.mxu0 0.0
    %1427 = vmatpush1.msra.mxu0 %v1367
    %1428 = vmatprep.subr.mxu0 0.0
    %1429 = vmatpush1.msra.mxu0 %v1368
    %1430 = vmatprep.subr.mxu0 0.0
    %1431 = vmatpush1.msra.mxu0 %v1369
    %1432 = vmatprep.subr.mxu0 0.0
    %1433 = vmatpush1.msra.mxu0 %v1370
    %1434 = vmatprep.subr.mxu0 0.0
    %1435 = vmatpush1.msra.mxu0 %v1371
    %1436 = vmatprep.subr.mxu0 0.0
    %1437 = vmatpush1.msra.mxu0 %v1372
    %1438 = vmatprep.subr.mxu0 0.0
    %1439 = vmatpush1.msra.mxu0 %v1373
    %1440 = vmatprep.subr.mxu0 0.0
    %1441 = vmatpush1.msra.mxu0 %v1374
    %1442 = vmatprep.subr.mxu0 0.0
    %1443 = vmatpush1.msra.mxu0 %v1375
    %1444 = vmatprep.subr.mxu0 0.0
    %1445 = vmatpush1.msra.mxu0 %v1376
    %1446 = vmatprep.subr.mxu0 0.0
    %1447 = vmatpush1.msra.mxu0 %v1377
    %1448 = vmatprep.subr.mxu0 0.0
    %1449 = vmatpush1.msra.mxu0 %v1378
    %1450 = vmatprep.mubr.f32.mxu0 %v1346
    %1451 = vmatmul.mubr.f32.gmra.mrb[0].mxu0 %v1345
    %v1452 = vpop.f32.mrb[0].mxu0
    %v1453 = vadd.f32 %v1384, %v1452
    %v1454 = vpop.f32.mrb[0].mxu0
    %1455 = vdwg.mxu0
    %1456 = vst [vmem:[#allocation11] sm:$0xff] %v1453
    // Predicated region
    $region46: #{mlp2_forward.1} parent=1 // pred_check
      _
    $region47: #{mlp2_forward.1} parent=1 // pred_check_branch
      %1458 = sbr.rel (0) target = $region49
    $region48: #{mlp2_forward.1} parent=1 // pred_region
      %s1460 = ssub.s32 128, 128
      %1461 = vsyncadd [#allocation4], %s1460
      %s1463 = sshll.u32 [#allocation11], 4
      %s1464 = int_to_ptr.vmem [resolvable:$true] %s1463
      %1466 = dma.vmem_to_hbm [thread:$0]  %s1464, 128, %s6, [#allocation4]
    $region49: #{mlp2_forward.1} parent=1 // pred_fallthru
      _
    // Predicated region
    $region50: #{mlp2_forward.1} parent=1 // pred_check
      _
    $region51: #{mlp2_forward.1} parent=1 // pred_check_branch
      %1468 = sbr.rel (0) target = $region53
    $region52: #{mlp2_forward.1} parent=1 // pred_region
      %1469 = dma.done [#allocation4], 128
    $region53: #{mlp2_forward.1} parent=1 // pred_fallthru
      _
    %1470 = vsyncpa [#allocation3], 1
    %1471 = vsyncpa [#allocation6], 1
    %1472 = vsyncpa [#allocation9], 1
    %1473 = vsyncpa [#allocation4], 1

</llo_original>
